<compile_context>
chip_gen: v7x
topology: tpu7x:2x2x1
jax: 0.10.0
libtpu: 0.0.40
codegen_flags: <defaults>
</compile_context>

<pallas_src>
import jax
import jax.numpy as jnp
from jax.experimental import pallas as pl
from jax.experimental.pallas import tpu as pltpu

# ---------------------------------------------------------------------------
# Small, deterministic configuration (mirrors MVT.__init__ arguments we need).
# ---------------------------------------------------------------------------
BS            = 2      # batch size (len(pc))
NUM_PTS       = 128    # points per sample
IMG_SIZE      = 16     # img_size
IMG_FEAT_DIM  = 3      # img_feat_dim
NUM_IMG       = 3      # simplified BoxRenderer: 3 orthographic axis views
ADD_CORR      = True   # add_corr
ADD_PIXEL_LOC = True   # add_pixel_loc
ADD_DEPTH     = False  # add_depth
ADD_PROPRIO   = False  # add_proprio
ADD_LANG      = False  # add_lang

HW       = IMG_SIZE * IMG_SIZE                     # 256 (lane-dense output dim)
C_RENDER = (3 if ADD_CORR else 0) + IMG_FEAT_DIM   # renderer output channels (6)
CNT_ROW  = C_RENDER                                # index of the "ones" feature row
C_PAD    = ((C_RENDER + 1 + 7) // 8) * 8           # 8: full-sublane output tiles

# Compare dtype for the one-hot mask: bf16 represents integers 0..256 exactly,
# so for HW <= 256 the compare runs on the (half-width) bf16 VALU path on
# v6e/v7x; for larger images fall back to f32 (exact up to 2^24).
_CMP_DTYPE = jnp.bfloat16 if HW <= 256 else jnp.float32


# ---------------------------------------------------------------------------
# Pallas kernel: fused multi-view point splatting (the renderer hot path).
#   mask[n, v*HW + p] = (pid[n, v] == p)              (N, V*HW)  bf16 one-hot
#   acc               = feat @ mask                   (C_PAD, V*HW) on the MXU
# Row CNT_ROW of feat is all-ones, so acc[CNT_ROW] is the per-pixel point
# count; the mean normalisation is a sublane-broadcast multiply by the EUP
# reciprocal.  Every store is a full (8, 256) lane-dense tile.
# ---------------------------------------------------------------------------
def _splat_kernel(pid_ref, feat_ref, out_ref, mask_ref):
    # pid_ref : (1, N, V)         int32  flattened pixel id of each point/view
    # feat_ref: (1, C_PAD, N)     bf16   rows = [pc, img_feat, ones, zero-pad]
    # out_ref : (1, V, C_PAD, HW) f32    rendered views, pixels on the lane axis
    # mask_ref: (N, V*HW)         bf16   scratch: fused one-hot splat matrix
    n = mask_ref.shape[0]
    n_views = out_ref.shape[1]
    hw = out_ref.shape[3]

    # Pixel iota, one cast, shared by all views (0..HW-1 exact in _CMP_DTYPE).
    pix = jax.lax.broadcasted_iota(jnp.int32, (n, hw), 1).astype(_CMP_DTYPE)
    pid_all = pid_ref[0].astype(_CMP_DTYPE)                     # (N, V)

    for v in range(n_views):                                    # static unroll
        mask_ref[:, v * hw:(v + 1) * hw] = (
            pix == pid_all[:, v:v + 1]).astype(jnp.bfloat16)    # exact one-hot

    # Single fused matmul for all views: (C_PAD, N) @ (N, V*HW) on the MXU.
    acc = jnp.dot(feat_ref[0], mask_ref[...],
                  preferred_element_type=jnp.float32)           # (C_PAD, V*HW)

    cnt = acc[CNT_ROW:CNT_ROW + 1, :]                           # (1, V*HW) counts
    inv = pl.reciprocal(jnp.maximum(cnt, 1.0), approx=True)     # EUP, ~2^-12 err
    outv = acc * inv                                            # mean splat

    for v in range(n_views):                                    # lane-dense stores
        out_ref[0, v] = outv[:, v * hw:(v + 1) * hw]            # full (8, 256) tile


def splat_points(pid, feat_t):
    """pid: (B, N, V) int32, feat_t: (B, C_PAD, N) bf16 -> (B, V, C_PAD, HW) f32."""
    b, n, v = pid.shape
    c_pad = feat_t.shape[1]
    return pl.pallas_call(
        _splat_kernel,
        out_shape=jax.ShapeDtypeStruct((b, v, c_pad, HW), jnp.float32),
        grid=(b,),                                   # 2 fat steps; v7x: 1 per TC
        in_specs=[
            pl.BlockSpec((1, n, v),     lambda bi: (bi, 0, 0)),
            pl.BlockSpec((1, c_pad, n), lambda bi: (bi, 0, 0)),
        ],
        out_specs=pl.BlockSpec((1, v, c_pad, HW), lambda bi: (bi, 0, 0, 0)),
        scratch_shapes=[pltpu.VMEM((n, v * HW), jnp.bfloat16)],
        compiler_params=pltpu.CompilerParams(
            dimension_semantics=("parallel",)),
    )(pid, feat_t)


# ---------------------------------------------------------------------------
# Plain-JAX glue: projection math, feature prep, pixel_loc parameter,
# verify_inp, and the (XLA-fused) noise+clamp augmentation.
# ---------------------------------------------------------------------------
def project_points(pc, img_size):
    """pc: (B, N, 3) in [-1, 1] -> flattened pixel id per view (B, N, V) int32."""
    pids = []
    for drop_axis in range(NUM_IMG):                # views: drop x / y / z
        keep = [a for a in range(3) if a != drop_axis]
        # NOTE: jnp.round uses ties-to-even; exact .5 boundaries may land in a
        # different pixel than the pytorch3d renderer would choose.
        r = jnp.clip(jnp.round((pc[..., keep[0]] + 1.0) * 0.5 * (img_size - 1)),
                     0, img_size - 1).astype(jnp.int32)
        c = jnp.clip(jnp.round((pc[..., keep[1]] + 1.0) * 0.5 * (img_size - 1)),
                     0, img_size - 1).astype(jnp.int32)
        pids.append(r * img_size + c)               # (B, N)
    return jnp.stack(pids, axis=-1)                 # (B, N, V): sublane-oriented


def prep_feat(feat):
    """feat: (B, N, C) f32 -> (B, C_PAD, N) bf16 rows [feat, ones, zero-pad].

    bf16 feature cast introduces ~4e-3 abs error on values in [-1,1]; the
    one-hot mask, ones row and counts stay exact."""
    b, n, c = feat.shape
    ones = jnp.ones((b, n, 1), feat.dtype)
    pad = jnp.zeros((b, n, C_PAD - c - 1), feat.dtype)
    feat_aug = jnp.concatenate([feat, ones, pad], axis=-1)     # (B, N, C_PAD)
    return jnp.transpose(feat_aug, (0, 2, 1)).astype(jnp.bfloat16)


def make_pixel_loc(num_img, img_size):
    """MVTSingle.pixel_loc: (num_img, 3, img_size, img_size)."""
    p = jnp.zeros((num_img, 3, img_size, img_size), jnp.float32)
    p = p.at[:, 0].set(jnp.linspace(-1.0, 1.0, num_img)[:, None, None])
    p = p.at[:, 1].set(jnp.linspace(-1.0, 1.0, img_size)[None, :, None])
    p = p.at[:, 2].set(jnp.linspace(-1.0, 1.0, img_size)[None, None, :])
    return p


def verify_inp(pc, img_feat, proprio, lang_emb, img_aug, training):
    if not training:
        assert img_aug == 0
    bs = pc.shape[0]
    assert bs == img_feat.shape[0]
    assert pc.shape[1] == img_feat.shape[1]
    assert pc.shape[2] == 3
    assert img_feat.shape[2] == IMG_FEAT_DIM
    if ADD_PROPRIO:
        assert proprio is not None
    else:
        assert proprio is None
    if not ADD_LANG:
        assert lang_emb is None


# ---------------------------------------------------------------------------
# MVT forward.
# ---------------------------------------------------------------------------
def mvt_forward(params, pc, img_feat, proprio=None, lang_emb=None,
                img_aug=0.0, rng=None, training=True):
    verify_inp(pc, img_feat, proprio, lang_emb, img_aug, training)
    bs = pc.shape[0]

    # ---- render() -----------------------------------------------------------
    if ADD_CORR:
        feat = jnp.concatenate([pc, img_feat], axis=-1)       # (B, N, 3+F)
    else:
        feat = img_feat
    pid = project_points(pc, IMG_SIZE)                         # (B, N, V)

    hm = splat_points(pid, prep_feat(feat))                    # (B, V, C_PAD, HW)
    # Channels are already view-major / pixel-minor -> slicing the padded
    # channels and reshaping HW->(H,W) is free layout plumbing (no permute).
    img = hm[:, :, :C_RENDER, :].reshape(bs, NUM_IMG, C_RENDER,
                                         IMG_SIZE, IMG_SIZE)

    # torch: mvt.img = img[:, :, 3:].clone().detach()  (BEFORE augmentation)
    mvt_img = img[:, :, 3:] if ADD_CORR else img

    # img_aug must stay a static Python float (matches the reference, which
    # branches on a float hyperparameter); do NOT pass a traced value here.
    if img_aug != 0:
        k1, k2 = jax.random.split(rng)
        stdv = img_aug * jax.random.uniform(k1, (1,), jnp.float32)
        noise = stdv * (2.0 * jax.random.uniform(k2, img.shape, jnp.float32) - 1.0)
        img = jnp.clip(img + noise, -1.0, 1.0)                 # XLA fuses add+clip

    if ADD_PIXEL_LOC:
        # Left in XLA on purpose: pixel_loc is concatenated AFTER augmentation
        # in the reference, so folding it into the splat kernel would force a
        # slice/re-concat around the aug anyway.
        ploc = jnp.broadcast_to(params["pixel_loc"][None],
                                (bs,) + params["pixel_loc"].shape)
        img = jnp.concatenate([img, ploc], axis=2)             # (B, V, C+3, H, W)

    # ---- self.mvt1(img=img, proprio=..., lang_emb=...) ----------------------
    # TODO(synk): MVTSingle transformer body not provided in the reference
    #             module; return its input (rendered multi-view image) and the
    #             cached mvt.img tensor instead of faking the transformer.
    return img, mvt_img


# ---------------------------------------------------------------------------
# Demo / smoke test.
# ---------------------------------------------------------------------------
if __name__ == "__main__":
    key = jax.random.PRNGKey(0)
    k_pc, k_feat, k_aug = jax.random.split(key, 3)

    # point cloud normalised to [-1, 1]^3 (as RVT does before rendering)
    pc = jax.random.uniform(k_pc, (BS, NUM_PTS, 3), jnp.float32,
                            minval=-1.0, maxval=1.0)
    img_feat = jax.random.uniform(k_feat, (BS, NUM_PTS, IMG_FEAT_DIM),
                                  jnp.float32, minval=-1.0, maxval=1.0)

    params = {"pixel_loc": make_pixel_loc(NUM_IMG, IMG_SIZE)}

    img_out, mvt_img = mvt_forward(params, pc, img_feat,
                                   proprio=None, lang_emb=None,
                                   img_aug=0.05, rng=k_aug, training=True)
    jax.block_until_ready(img_out)
    jax.block_until_ready(mvt_img)

    expected_c = C_RENDER + (3 if ADD_PIXEL_LOC else 0)
    assert img_out.shape == (BS, NUM_IMG, expected_c, IMG_SIZE, IMG_SIZE)
    assert mvt_img.shape == (BS, NUM_IMG, IMG_FEAT_DIM, IMG_SIZE, IMG_SIZE)

    # Correctness: Pallas splat vs pure-JAX scatter-mean reference
    # (tolerance covers the bf16 feature cast fed to the MXU, ~4e-3, plus the
    # ~2^-12 relative error of the EUP approximate reciprocal).
    feat = jnp.concatenate([pc, img_feat], axis=-1)            # (B, N, 6)
    pid = project_points(pc, IMG_SIZE)                         # (B, N, V)
    hm = splat_points(pid, prep_feat(feat))                    # (B, V, C_PAD, HW)
    pid_bvn = jnp.transpose(pid, (0, 2, 1))                    # (B, V, N)
    onehot = (pid_bvn[..., None] ==
              jnp.arange(HW)[None, None, None, :]).astype(jnp.float32)
    acc = jnp.einsum('bnc,bvnp->bvcp', feat, onehot,
                     precision=jax.lax.Precision.HIGHEST)
    cnt = jnp.maximum(jnp.sum(onehot, axis=2)[:, :, None, :], 1.0)
    ref = acc / cnt
    err = float(jnp.max(jnp.abs(hm[:, :, :C_RENDER, :] - ref)))
    assert err < 1e-2, f"splat mismatch vs reference: max abs err = {err}"

    print("KERNEL_OK")
</pallas_src>

<mosaic_0001>
module attributes {stable_mosaic.version = 11 : i64} {
  func.func @_splat_kernel(%arg0: i32, %arg1: memref<1x128x3xi32, #tpu.memory_space<vmem>>, %arg2: memref<1x8x128xbf16, #tpu.memory_space<vmem>>, %arg3: memref<1x3x8x256xf32, #tpu.memory_space<vmem>>, %arg4: memref<128x768xbf16, #tpu.memory_space<vmem>>) attributes {dimension_semantics = [#tpu.dimension_semantics<parallel>], iteration_bounds = array<i64: 2>, scalar_prefetch = 0 : i64, scratch_operands = 1 : i64, tpu.core_type = #tpu.core_type<tc>, window_params = [{transform_indices = @transform_0, window_bounds = array<i64: 1, 128, 3>}, {transform_indices = @transform_1, window_bounds = array<i64: 1, 8, 128>}, {transform_indices = @transform_2, window_bounds = array<i64: 1, 3, 8, 256>}]} {
    %0 = tpu.iota {dimensions = array<i32: 1>} : vector<128x256xi32>
    %1 = arith.sitofp %0 : vector<128x256xi32> to vector<128x256xbf16>
    %c0 = arith.constant 0 : index
    %c0_0 = arith.constant 0 : index
    %c0_1 = arith.constant 0 : index
    %2 = vector.load %arg1[%c0, %c0_0, %c0_1] : memref<1x128x3xi32, #tpu.memory_space<vmem>>, vector<1x128x3xi32>
    %3 = vector.shape_cast %2 : vector<1x128x3xi32> to vector<128x3xi32>
    %4 = arith.sitofp %3 : vector<128x3xi32> to vector<128x3xbf16>
    %5 = vector.extract_strided_slice %4 {offsets = [0, 0], sizes = [128, 1], strides = [1, 1]} : vector<128x3xbf16> to vector<128x1xbf16>
    %6 = vector.broadcast %5 : vector<128x1xbf16> to vector<128x256xbf16>
    %7 = arith.cmpf oeq, %1, %6 : vector<128x256xbf16>
    %8 = arith.extui %7 : vector<128x256xi1> to vector<128x256xi32>
    %9 = arith.sitofp %8 : vector<128x256xi32> to vector<128x256xf32>
    %10 = arith.truncf %9 : vector<128x256xf32> to vector<128x256xbf16>
    %c0_2 = arith.constant 0 : index
    %c0_3 = arith.constant 0 : index
    %11 = vector.load %arg4[%c0_2, %c0_3] : memref<128x768xbf16, #tpu.memory_space<vmem>>, vector<128x256xbf16>
    tpu.vector_store %arg4[%c0_2, %c0_3], %10 {strides = array<i32>} : memref<128x768xbf16, #tpu.memory_space<vmem>>, vector<128x256xbf16>,
    %12 = vector.extract_strided_slice %4 {offsets = [0, 1], sizes = [128, 1], strides = [1, 1]} : vector<128x3xbf16> to vector<128x1xbf16>
    %13 = vector.broadcast %12 : vector<128x1xbf16> to vector<128x256xbf16>
    %14 = arith.cmpf oeq, %1, %13 : vector<128x256xbf16>
    %15 = arith.extui %14 : vector<128x256xi1> to vector<128x256xi32>
    %16 = arith.sitofp %15 : vector<128x256xi32> to vector<128x256xf32>
    %17 = arith.truncf %16 : vector<128x256xf32> to vector<128x256xbf16>
    %c0_4 = arith.constant 0 : index
    %c256 = arith.constant 256 : index
    %18 = vector.load %arg4[%c0_4, %c256] : memref<128x768xbf16, #tpu.memory_space<vmem>>, vector<128x256xbf16>
    tpu.vector_store %arg4[%c0_4, %c256], %17 {strides = array<i32>} : memref<128x768xbf16, #tpu.memory_space<vmem>>, vector<128x256xbf16>,
    %19 = vector.extract_strided_slice %4 {offsets = [0, 2], sizes = [128, 1], strides = [1, 1]} : vector<128x3xbf16> to vector<128x1xbf16>
    %20 = vector.broadcast %19 : vector<128x1xbf16> to vector<128x256xbf16>
    %21 = arith.cmpf oeq, %1, %20 : vector<128x256xbf16>
    %22 = arith.extui %21 : vector<128x256xi1> to vector<128x256xi32>
    %23 = arith.sitofp %22 : vector<128x256xi32> to vector<128x256xf32>
    %24 = arith.truncf %23 : vector<128x256xf32> to vector<128x256xbf16>
    %c0_5 = arith.constant 0 : index
    %c512 = arith.constant 512 : index
    %25 = vector.load %arg4[%c0_5, %c512] : memref<128x768xbf16, #tpu.memory_space<vmem>>, vector<128x256xbf16>
    tpu.vector_store %arg4[%c0_5, %c512], %24 {strides = array<i32>} : memref<128x768xbf16, #tpu.memory_space<vmem>>, vector<128x256xbf16>,
    %c0_6 = arith.constant 0 : index
    %c0_7 = arith.constant 0 : index
    %c0_8 = arith.constant 0 : index
    %26 = vector.load %arg2[%c0_6, %c0_7, %c0_8] : memref<1x8x128xbf16, #tpu.memory_space<vmem>>, vector<1x8x128xbf16>
    %27 = vector.shape_cast %26 : vector<1x8x128xbf16> to vector<8x128xbf16>
    %c0_9 = arith.constant 0 : index
    %c0_10 = arith.constant 0 : index
    %28 = vector.load %arg4[%c0_9, %c0_10] : memref<128x768xbf16, #tpu.memory_space<vmem>>, vector<128x768xbf16>
    %cst = arith.constant dense<0.000000e+00> : vector<8x768xf32>
    %29 = tpu.matmul %27, %28, %cst {dimension_numbers = #tpu.dot_dimension_numbers<[1], [0], [0], [1], [0, 0, 1, 1], [], []>} : vector<8x128xbf16>, vector<128x768xbf16>, vector<8x768xf32> -> vector<8x768xf32>
    %30 = vector.extract_strided_slice %29 {offsets = [6, 0], sizes = [1, 768], strides = [1, 1]} : vector<8x768xf32> to vector<1x768xf32>
    %cst_11 = arith.constant 1.000000e+00 : f32
    %31 = vector.broadcast %cst_11 : f32 to vector<1x768xf32>
    %32 = arith.maximumf %30, %31 : vector<1x768xf32>
    %33 = tpu.reciprocal %32 {approx = true} : vector<1x768xf32> -> vector<1x768xf32>
    %34 = vector.broadcast %33 : vector<1x768xf32> to vector<8x768xf32>
    %35 = arith.mulf %29, %34 : vector<8x768xf32>
    %36 = vector.extract_strided_slice %35 {offsets = [0, 0], sizes = [8, 256], strides = [1, 1]} : vector<8x768xf32> to vector<8x256xf32>
    %c0_12 = arith.constant 0 : index
    %c0_13 = arith.constant 0 : index
    %c0_14 = arith.constant 0 : index
    %c0_15 = arith.constant 0 : index
    %37 = vector.load %arg3[%c0_12, %c0_13, %c0_14, %c0_15] : memref<1x3x8x256xf32, #tpu.memory_space<vmem>>, vector<1x1x8x256xf32>
    %38 = vector.shape_cast %37 : vector<1x1x8x256xf32> to vector<8x256xf32>
    %39 = vector.shape_cast %36 : vector<8x256xf32> to vector<1x1x8x256xf32>
    tpu.vector_store %arg3[%c0_12, %c0_13, %c0_14, %c0_15], %39 {strides = array<i32>} : memref<1x3x8x256xf32, #tpu.memory_space<vmem>>, vector<1x1x8x256xf32>,
    %40 = vector.extract_strided_slice %35 {offsets = [0, 256], sizes = [8, 256], strides = [1, 1]} : vector<8x768xf32> to vector<8x256xf32>
    %c0_16 = arith.constant 0 : index
    %c1 = arith.constant 1 : index
    %c0_17 = arith.constant 0 : index
    %c0_18 = arith.constant 0 : index
    %41 = vector.load %arg3[%c0_16, %c1, %c0_17, %c0_18] : memref<1x3x8x256xf32, #tpu.memory_space<vmem>>, vector<1x1x8x256xf32>
    %42 = vector.shape_cast %41 : vector<1x1x8x256xf32> to vector<8x256xf32>
    %43 = vector.shape_cast %40 : vector<8x256xf32> to vector<1x1x8x256xf32>
    tpu.vector_store %arg3[%c0_16, %c1, %c0_17, %c0_18], %43 {strides = array<i32>} : memref<1x3x8x256xf32, #tpu.memory_space<vmem>>, vector<1x1x8x256xf32>,
    %44 = vector.extract_strided_slice %35 {offsets = [0, 512], sizes = [8, 256], strides = [1, 1]} : vector<8x768xf32> to vector<8x256xf32>
    %c0_19 = arith.constant 0 : index
    %c2 = arith.constant 2 : index
    %c0_20 = arith.constant 0 : index
    %c0_21 = arith.constant 0 : index
    %45 = vector.load %arg3[%c0_19, %c2, %c0_20, %c0_21] : memref<1x3x8x256xf32, #tpu.memory_space<vmem>>, vector<1x1x8x256xf32>
    %46 = vector.shape_cast %45 : vector<1x1x8x256xf32> to vector<8x256xf32>
    %47 = vector.shape_cast %44 : vector<8x256xf32> to vector<1x1x8x256xf32>
    tpu.vector_store %arg3[%c0_19, %c2, %c0_20, %c0_21], %47 {strides = array<i32>} : memref<1x3x8x256xf32, #tpu.memory_space<vmem>>, vector<1x1x8x256xf32>,
    return
  }
  func.func @transform_0(%arg0: i32) -> (i32, i32, i32) {
    %c0_i32 = arith.constant 0 : i32
    %c0_i32_0 = arith.constant 0 : i32
    %c0_i32_1 = arith.constant 0 : i32
    return %arg0, %c0_i32, %c0_i32_0 : i32, i32, i32
  }
  func.func @transform_1(%arg0: i32) -> (i32, i32, i32) {
    %c0_i32 = arith.constant 0 : i32
    %c0_i32_0 = arith.constant 0 : i32
    %c0_i32_1 = arith.constant 0 : i32
    return %arg0, %c0_i32, %c0_i32_0 : i32, i32, i32
  }
  func.func @transform_2(%arg0: i32) -> (i32, i32, i32, i32) {
    %c0_i32 = arith.constant 0 : i32
    %c0_i32_0 = arith.constant 0 : i32
    %c0_i32_1 = arith.constant 0 : i32
    %c0_i32_2 = arith.constant 0 : i32
    return %arg0, %c0_i32, %c0_i32_0, %c0_i32_1 : i32, i32, i32, i32
  }
}

</mosaic_0001>

<llo_original>
// kernel: tpu_custom_call.1
$region0: #{tpu_custom_call.1}
  #allocation0 [shape = 'u32[]', space=smem, size = 0x4, offset = 0x4, fixed_abs, tag = 'smem constant byte address 0x4 - core index']
  #allocation1 [shape = 'u32[144,128]{1,0:T(1,128)}', space=vmem, size = 0x12000, scoped, tag = 'internal scratch']
  #allocation2 [shape = 'bf16[128,768]{1,0:T(16,128)(2,1)}', space=vmem, size = 0x30000, scoped, tag = 'scratch operand']
  %s0 = inlined_call_operand.vmem [shape: s32[2,128,3], index: 0, kind: input, shape index: {}]
  %s1 = inlined_call_operand.vmem [shape: bf16[2,8,128], index: 1, kind: input, shape index: {}]
  %s2 = inlined_call_operand.hbm [shape: f32[2,3,8,256], index: 2, kind: output, shape index: {}]
  %s3 = sld [smem:[#allocation0]]
  $region41: #{tpu_custom_call.1} parent=0
    _
  %s5 = ssub.s32 1, %s3
  %s6 = scalar_select 0, %s5, %s3
  $region1: #{tpu_custom_call.1} parent=0
    #allocation3 [shape = 'u8[49152]{0}', space=vmem, size = 0xc000, scoped, tag = 'output window, operand 0']
    #allocation4 [shape = 's32[2]{0}', space=sflag, size = 0x8, scoped, tag = 'scoped memory for tpu_custom_call.1']
    %7 = vsyncpa [#allocation4], 0
    %s8 = scalar_lea.sflag [#allocation4], 1
    %9 = vsyncpa %s8, 0
    loop: start=0, step=1, limit=4
    $region2: #{tpu_custom_call.1} parent=1 // loop_pre_header
      _
    $region3: #{tpu_custom_call.1} parent=1 // loop_header
      %s11 = sphi 0, %s15
      %p12 = scmp.ge.s32.totalorder %s11, 4
      %s21 = sphi 0, %s23
      %s24 = sphi 0, %s21
      %s25 = sphi 0, %s24
      %s41 = sphi 0, %s25
      %s47 = sphi 0, %s49
      %s50 = sphi 0, %s47
      %s51 = sphi 0, %s50
      %s67 = sphi 0, %s51
      %s73 = sphi 0, %s75
      %s76 = sphi 0, %s73
      %s77 = sphi 0, %s76
      %s93 = sphi 0, %s77
    $region4: #{tpu_custom_call.1} parent=1 // loop_header_branch
      %14 = sbr.rel (%p12) target = $region8
    $region5: #{tpu_custom_call.1} parent=1 // loop_body
      %s16 = ssub.s32 %s11, 1
      %s17 = ssub.s32 %s11, 2
      %s18 = sadd.s32 %s11, 1
      %s19 = ssub.s32 %s11, %s18
      %p20 = scmp.eq.s32.totalorder %s19, 0
      %s22 = sadd.s32 %s21, 1
      %s23 = scalar_select %p20, %s21, %s22
      %p26 = pneg %p20
      %p27 = scmp.eq.s32.totalorder %s11, 1
      %p28 = por %p26, %p27
      %p29 = scmp.ne.s32.totalorder %s21, %s24
      %p30 = scmp.eq.s32.totalorder %s11, 0
      %p31 = por %p29, %p30
      %p32 = scmp.ne.s32.totalorder %s21, %s24
      %p33 = scmp.eq.s32.totalorder %s16, 1
      %p34 = por %p32, %p33
      %p35 = scmp.ne.s32.totalorder %s24, %s25
      %p36 = scmp.eq.s32.totalorder %s16, 0
      %p37 = por %p35, %p36
      %p38 = scmp.ne.s32.totalorder %s24, %s25
      %p39 = scmp.eq.s32.totalorder %s17, 1
      %p40 = por %p38, %p39
      %p42 = scmp.ne.s32.totalorder %s25, %s41
      %p43 = scmp.eq.s32.totalorder %s17, 0
      %p44 = por %p42, %p43
      %s45 = ssub.s32 %s11, %s18
      %p46 = scmp.eq.s32.totalorder %s45, 0
      %s48 = sadd.s32 %s47, 1
      %s49 = scalar_select %p46, %s47, %s48
      %p52 = pneg %p46
      %p53 = scmp.eq.s32.totalorder %s11, 1
      %p54 = por %p52, %p53
      %p55 = scmp.ne.s32.totalorder %s47, %s50
      %p56 = scmp.eq.s32.totalorder %s11, 0
      %p57 = por %p55, %p56
      %p58 = scmp.ne.s32.totalorder %s47, %s50
      %p59 = scmp.eq.s32.totalorder %s16, 1
      %p60 = por %p58, %p59
      %p61 = scmp.ne.s32.totalorder %s50, %s51
      %p62 = scmp.eq.s32.totalorder %s16, 0
      %p63 = por %p61, %p62
      %p64 = scmp.ne.s32.totalorder %s50, %s51
      %p65 = scmp.eq.s32.totalorder %s17, 1
      %p66 = por %p64, %p65
      %p68 = scmp.ne.s32.totalorder %s51, %s67
      %p69 = scmp.eq.s32.totalorder %s17, 0
      %p70 = por %p68, %p69
      %s71 = ssub.s32 %s11, %s18
      %p72 = scmp.eq.s32.totalorder %s71, 0
      %s74 = sadd.s32 %s73, 1
      %s75 = scalar_select %p72, %s73, %s74
      %p78 = pneg %p72
      %p79 = scmp.eq.s32.totalorder %s11, 1
      %p80 = por %p78, %p79
      %p81 = scmp.ne.s32.totalorder %s73, %s76
      %p82 = scmp.eq.s32.totalorder %s11, 0
      %p83 = por %p81, %p82
      %p84 = scmp.ne.s32.totalorder %s73, %s76
      %p85 = scmp.eq.s32.totalorder %s16, 1
      %p86 = por %p84, %p85
      %p87 = scmp.ne.s32.totalorder %s76, %s77
      %p88 = scmp.eq.s32.totalorder %s16, 0
      %p89 = por %p87, %p88
      %p90 = scmp.ne.s32.totalorder %s76, %s77
      %p91 = scmp.eq.s32.totalorder %s17, 1
      %p92 = por %p90, %p91
      %p94 = scmp.ne.s32.totalorder %s77, %s93
      %p95 = scmp.eq.s32.totalorder %s17, 0
      %p96 = por %p94, %p95
      %p97 = scmp.le.s32.totalorder 1, %s11
      %p98 = scmp.lt.s32.totalorder %s11, 3
      %p99 = pnand %p97, %p98
      %p100 = pneg %p99
      // Predicated region
      $region9: #{tpu_custom_call.1} parent=5 // pred_check
        _
      $region10: #{tpu_custom_call.1} parent=5 // pred_check_branch
        %102 = sbr.rel (%p99) target = $region12
      $region11: #{tpu_custom_call.1} parent=5 // pred_region
        %s103 = ssub.s32 %s11, 1
      $region12: #{tpu_custom_call.1} parent=5 // pred_fallthru
        _
      %p104 = scmp.lt.s32.totalorder %s11, 2
      // Predicated region
      $region13: #{tpu_custom_call.1} parent=5 // pred_check
        %p105 = pneg %p104
      $region14: #{tpu_custom_call.1} parent=5 // pred_check_branch
        %107 = sbr.rel (%p105) target = $region16
      $region15: #{tpu_custom_call.1} parent=5 // pred_region
        // Predicated region
        $region17: #{tpu_custom_call.1} parent=15 // pred_check
          %p108 = pneg %p31
        $region18: #{tpu_custom_call.1} parent=15 // pred_check_branch
          %110 = sbr.rel (%p108) target = $region20
        $region19: #{tpu_custom_call.1} parent=15 // pred_region
          %p111 = scmp.lt.s32.totalorder %s11, 1
          %s112 = scalar_select %p111, %s11, 1
          %s113 = smul.addr %s112, 16
          %s114 = smul.addr %s113, 8
          %s115 = scalar_lea.vmem %s0, %s114
        $region20: #{tpu_custom_call.1} parent=15 // pred_fallthru
          _
        // Predicated region
        $region21: #{tpu_custom_call.1} parent=15 // pred_check
          %p116 = pneg %p57
        $region22: #{tpu_custom_call.1} parent=15 // pred_check_branch
          %118 = sbr.rel (%p116) target = $region24
        $region23: #{tpu_custom_call.1} parent=15 // pred_region
          %p119 = scmp.lt.s32.totalorder %s11, 1
          %s120 = scalar_select %p119, %s11, 1
          %s121 = smul.addr %s120, 4
          %s122 = scalar_lea.vmem %s1, %s121
        $region24: #{tpu_custom_call.1} parent=15 // pred_fallthru
          _
      $region16: #{tpu_custom_call.1} parent=5 // pred_fallthru
        _
      %p123 = scmp.le.s32.totalorder 1, %s11
      %p124 = scmp.lt.s32.totalorder %s11, 3
      %p125 = pnand %p123, %p124
      %p126 = pneg %p125
      // Predicated region
      $region25: #{tpu_custom_call.1} parent=5 // pred_check
        _
      $region26: #{tpu_custom_call.1} parent=5 // pred_check_branch
        %128 = sbr.rel (%p125) target = $region28
      $region27: #{tpu_custom_call.1} parent=5 // pred_region
        %s129 = ssub.s32 %s11, 1
        %p130 = scmp.lt.s32.totalorder %s16, 1
        %s131 = scalar_select %p130, %s16, 1
        %s132 = smul.addr %s131, 16
        %s133 = smul.addr %s132, 8
        %s134 = scalar_lea.vmem %s0, %s133
        %p135 = pneg %p37
        %p136 = pneg %p34
        %p137 = scmp.lt.s32.totalorder %s16, 1
        %s138 = scalar_select %p137, %s16, 1
        %s139 = smul.addr %s138, 4
        %s140 = scalar_lea.vmem %s1, %s139
        %p141 = pneg %p63
        %p142 = pneg %p60
        %p143 = pneg %p89
        %p144 = pneg %p86
        %s145 = sand.u32 %s76, 1
        %s146 = scalar_lea.sflag [#allocation4], %s145
        %s147 = sand.u32 %s76, 1
        %s148 = smul.addr %s147, 48
        %s149 = scalar_lea.vmem [#allocation3], %s148
        %p150 = scmp.lt.s32.totalorder %s16, 1
        %s151 = scalar_select %p150, %s16, 1
        %s152 = smul.addr %s151, 16
        %s153 = smul.addr %s152, 8
        %s154 = scalar_lea.vmem %s0, %s153
        %p155 = scmp.lt.s32.totalorder %s16, 1
        %s156 = scalar_select %p155, %s16, 1
        %s157 = smul.addr %s156, 4
        %s158 = scalar_lea.vmem %s1, %s157
        %v162 = vlaneseq
        %v163 = vand.u32 %v162, 127
        %v164 = vadd.s32 %v163, 128
        %v165 = vcvt.s32.f32 %v163
        %v166 = vcvt.s32.f32 %v164
        %v167 = vpack.c.bf16 %v165, %v165
        %v168 = vpack.c.bf16 %v166, %v166
        %v169 = vld [vmem:[%s154] sm:$0xff]
        %v170 = vld [vmem:[%s154 + $0x8] sm:$0xff]
        %v171 = vld [vmem:[%s154 + $0x10] sm:$0xff]
        %v172 = vld [vmem:[%s154 + $0x18] sm:$0xff]
        %v173 = vld [vmem:[%s154 + $0x20] sm:$0xff]
        %v174 = vld [vmem:[%s154 + $0x28] sm:$0xff]
        %v175 = vld [vmem:[%s154 + $0x30] sm:$0xff]
        %v176 = vld [vmem:[%s154 + $0x38] sm:$0xff]
        %v177 = vld [vmem:[%s154 + $0x40] sm:$0xff]
        %v178 = vld [vmem:[%s154 + $0x48] sm:$0xff]
        %v179 = vld [vmem:[%s154 + $0x50] sm:$0xff]
        %v180 = vld [vmem:[%s154 + $0x58] sm:$0xff]
        %v181 = vld [vmem:[%s154 + $0x60] sm:$0xff]
        %v182 = vld [vmem:[%s154 + $0x68] sm:$0xff]
        %v183 = vld [vmem:[%s154 + $0x70] sm:$0xff]
        %v184 = vld [vmem:[%s154 + $0x78] sm:$0xff]
        %v185 = vcvt.s32.f32 %v169
        %v186 = vcvt.s32.f32 %v170
        %v187 = vcvt.s32.f32 %v171
        %v188 = vcvt.s32.f32 %v172
        %v189 = vcvt.s32.f32 %v173
        %v190 = vcvt.s32.f32 %v174
        %v191 = vcvt.s32.f32 %v175
        %v192 = vcvt.s32.f32 %v176
        %v193 = vcvt.s32.f32 %v177
        %v194 = vcvt.s32.f32 %v178
        %v195 = vcvt.s32.f32 %v179
        %v196 = vcvt.s32.f32 %v180
        %v197 = vcvt.s32.f32 %v181
        %v198 = vcvt.s32.f32 %v182
        %v199 = vcvt.s32.f32 %v183
        %v200 = vcvt.s32.f32 %v184
        %v201 = vpack.c.bf16 %v186, %v185
        %v202 = vpack.c.bf16 %v188, %v187
        %v203 = vpack.c.bf16 %v190, %v189
        %v204 = vpack.c.bf16 %v192, %v191
        %v205 = vpack.c.bf16 %v194, %v193
        %v206 = vpack.c.bf16 %v196, %v195
        %v207 = vpack.c.bf16 %v198, %v197
        %v208 = vpack.c.bf16 %v200, %v199
        %210 = vset.pattern.permute.xlu0 0
        %211 = vperm.xlu0 %210, %v201
        %v212 = vpop.permute.xlu0 %211
        %215 = vset.pattern.permute.xlu0 0
        %216 = vperm.xlu0 %215, %v202
        %v217 = vpop.permute.xlu0 %216
        %220 = vset.pattern.permute.xlu0 0
        %221 = vperm.xlu0 %220, %v203
        %v222 = vpop.permute.xlu0 %221
        %225 = vset.pattern.permute.xlu0 0
        %226 = vperm.xlu0 %225, %v204
        %v227 = vpop.permute.xlu0 %226
        %230 = vset.pattern.permute.xlu0 0
        %231 = vperm.xlu0 %230, %v205
        %v232 = vpop.permute.xlu0 %231
        %235 = vset.pattern.permute.xlu0 0
        %236 = vperm.xlu0 %235, %v206
        %v237 = vpop.permute.xlu0 %236
        %240 = vset.pattern.permute.xlu0 0
        %241 = vperm.xlu0 %240, %v207
        %v242 = vpop.permute.xlu0 %241
        %245 = vset.pattern.permute.xlu0 0
        %246 = vperm.xlu0 %245, %v208
        %v247 = vpop.permute.xlu0 %246
        %vm249 = vcmp.eq.bf16.partialorder %v167, %v212
        %vm250 = vcmp.eq.bf16.partialorder %v168, %v212
        %vm251 = vcmp.eq.bf16.partialorder %v167, %v217
        %vm252 = vcmp.eq.bf16.partialorder %v168, %v217
        %vm253 = vcmp.eq.bf16.partialorder %v167, %v222
        %vm254 = vcmp.eq.bf16.partialorder %v168, %v222
        %vm255 = vcmp.eq.bf16.partialorder %v167, %v227
        %vm256 = vcmp.eq.bf16.partialorder %v168, %v227
        %vm257 = vcmp.eq.bf16.partialorder %v167, %v232
        %vm258 = vcmp.eq.bf16.partialorder %v168, %v232
        %vm259 = vcmp.eq.bf16.partialorder %v167, %v237
        %vm260 = vcmp.eq.bf16.partialorder %v168, %v237
        %vm261 = vcmp.eq.bf16.partialorder %v167, %v242
        %vm262 = vcmp.eq.bf16.partialorder %v168, %v242
        %vm263 = vcmp.eq.bf16.partialorder %v167, %v247
        %vm264 = vcmp.eq.bf16.partialorder %v168, %v247
        %v265 = vsel %vm249, 65537, 0
        %v266 = vsel %vm250, 65537, 0
        %v267 = vsel %vm251, 65537, 0
        %v268 = vsel %vm252, 65537, 0
        %v269 = vsel %vm253, 65537, 0
        %v270 = vsel %vm254, 65537, 0
        %v271 = vsel %vm255, 65537, 0
        %v272 = vsel %vm256, 65537, 0
        %v273 = vsel %vm257, 65537, 0
        %v274 = vsel %vm258, 65537, 0
        %v275 = vsel %vm259, 65537, 0
        %v276 = vsel %vm260, 65537, 0
        %v277 = vsel %vm261, 65537, 0
        %v278 = vsel %vm262, 65537, 0
        %v279 = vsel %vm263, 65537, 0
        %v280 = vsel %vm264, 65537, 0
        %v281 = vunpack.c.l.b16 %v265
        %v282 = vunpack.c.l.b16 %v266
        %v283 = vunpack.c.h.b16 %v265
        %v284 = vunpack.c.h.b16 %v266
        %v285 = vunpack.c.l.b16 %v267
        %v286 = vunpack.c.l.b16 %v268
        %v287 = vunpack.c.h.b16 %v267
        %v288 = vunpack.c.h.b16 %v268
        %v289 = vunpack.c.l.b16 %v269
        %v290 = vunpack.c.l.b16 %v270
        %v291 = vunpack.c.h.b16 %v269
        %v292 = vunpack.c.h.b16 %v270
        %v293 = vunpack.c.l.b16 %v271
        %v294 = vunpack.c.l.b16 %v272
        %v295 = vunpack.c.h.b16 %v271
        %v296 = vunpack.c.h.b16 %v272
        %v297 = vunpack.c.l.b16 %v273
        %v298 = vunpack.c.l.b16 %v274
        %v299 = vunpack.c.h.b16 %v273
        %v300 = vunpack.c.h.b16 %v274
        %v301 = vunpack.c.l.b16 %v275
        %v302 = vunpack.c.l.b16 %v276
        %v303 = vunpack.c.h.b16 %v275
        %v304 = vunpack.c.h.b16 %v276
        %v305 = vunpack.c.l.b16 %v277
        %v306 = vunpack.c.l.b16 %v278
        %v307 = vunpack.c.h.b16 %v277
        %v308 = vunpack.c.h.b16 %v278
        %v309 = vunpack.c.l.b16 %v279
        %v310 = vunpack.c.l.b16 %v280
        %v311 = vunpack.c.h.b16 %v279
        %v312 = vunpack.c.h.b16 %v280
        %v313 = vpack.c.b16 %v282, %v281
        %v314 = vpack.c.b16 %v284, %v283
        %v315 = vpack.c.b16 %v286, %v285
        %v316 = vpack.c.b16 %v288, %v287
        %v317 = vpack.c.b16 %v290, %v289
        %v318 = vpack.c.b16 %v292, %v291
        %v319 = vpack.c.b16 %v294, %v293
        %v320 = vpack.c.b16 %v296, %v295
        %v321 = vpack.c.b16 %v298, %v297
        %v322 = vpack.c.b16 %v300, %v299
        %v323 = vpack.c.b16 %v302, %v301
        %v324 = vpack.c.b16 %v304, %v303
        %v325 = vpack.c.b16 %v306, %v305
        %v326 = vpack.c.b16 %v308, %v307
        %v327 = vpack.c.b16 %v310, %v309
        %v328 = vpack.c.b16 %v312, %v311
        %vm329 = vcmp.ne.s16.totalorder %v313, 0
        %vm330 = vcmp.ne.s16.totalorder %v314, 0
        %vm331 = vcmp.ne.s16.totalorder %v315, 0
        %vm332 = vcmp.ne.s16.totalorder %v316, 0
        %vm333 = vcmp.ne.s16.totalorder %v317, 0
        %vm334 = vcmp.ne.s16.totalorder %v318, 0
        %vm335 = vcmp.ne.s16.totalorder %v319, 0
        %vm336 = vcmp.ne.s16.totalorder %v320, 0
        %vm337 = vcmp.ne.s16.totalorder %v321, 0
        %vm338 = vcmp.ne.s16.totalorder %v322, 0
        %vm339 = vcmp.ne.s16.totalorder %v323, 0
        %vm340 = vcmp.ne.s16.totalorder %v324, 0
        %vm341 = vcmp.ne.s16.totalorder %v325, 0
        %vm342 = vcmp.ne.s16.totalorder %v326, 0
        %vm343 = vcmp.ne.s16.totalorder %v327, 0
        %vm344 = vcmp.ne.s16.totalorder %v328, 0
        %v345 = vsel %vm329, 65537, 0
        %v346 = vsel %vm330, 65537, 0
        %v347 = vsel %vm331, 65537, 0
        %v348 = vsel %vm332, 65537, 0
        %v349 = vsel %vm333, 65537, 0
        %v350 = vsel %vm334, 65537, 0
        %v351 = vsel %vm335, 65537, 0
        %v352 = vsel %vm336, 65537, 0
        %v353 = vsel %vm337, 65537, 0
        %v354 = vsel %vm338, 65537, 0
        %v355 = vsel %vm339, 65537, 0
        %v356 = vsel %vm340, 65537, 0
        %v357 = vsel %vm341, 65537, 0
        %v358 = vsel %vm342, 65537, 0
        %v359 = vsel %vm343, 65537, 0
        %v360 = vsel %vm344, 65537, 0
        %v361 = vunpack.c.l.b16 %v345
        %v362 = vunpack.c.h.b16 %v345
        %v363 = vunpack.c.l.b16 %v346
        %v364 = vunpack.c.h.b16 %v346
        %v365 = vunpack.c.l.b16 %v347
        %v366 = vunpack.c.h.b16 %v347
        %v367 = vunpack.c.l.b16 %v348
        %v368 = vunpack.c.h.b16 %v348
        %v369 = vunpack.c.l.b16 %v349
        %v370 = vunpack.c.h.b16 %v349
        %v371 = vunpack.c.l.b16 %v350
        %v372 = vunpack.c.h.b16 %v350
        %v373 = vunpack.c.l.b16 %v351
        %v374 = vunpack.c.h.b16 %v351
        %v375 = vunpack.c.l.b16 %v352
        %v376 = vunpack.c.h.b16 %v352
        %v377 = vunpack.c.l.b16 %v353
        %v378 = vunpack.c.h.b16 %v353
        %v379 = vunpack.c.l.b16 %v354
        %v380 = vunpack.c.h.b16 %v354
        %v381 = vunpack.c.l.b16 %v355
        %v382 = vunpack.c.h.b16 %v355
        %v383 = vunpack.c.l.b16 %v356
        %v384 = vunpack.c.h.b16 %v356
        %v385 = vunpack.c.l.b16 %v357
        %v386 = vunpack.c.h.b16 %v357
        %v387 = vunpack.c.l.b16 %v358
        %v388 = vunpack.c.h.b16 %v358
        %v389 = vunpack.c.l.b16 %v359
        %v390 = vunpack.c.h.b16 %v359
        %v391 = vunpack.c.l.b16 %v360
        %v392 = vunpack.c.h.b16 %v360
        %vm393 = vcmp.ne.s32.totalorder %v361, 0
        %vm394 = vcmp.ne.s32.totalorder %v362, 0
        %vm395 = vcmp.ne.s32.totalorder %v363, 0
        %vm396 = vcmp.ne.s32.totalorder %v364, 0
        %vm397 = vcmp.ne.s32.totalorder %v365, 0
        %vm398 = vcmp.ne.s32.totalorder %v366, 0
        %vm399 = vcmp.ne.s32.totalorder %v367, 0
        %vm400 = vcmp.ne.s32.totalorder %v368, 0
        %vm401 = vcmp.ne.s32.totalorder %v369, 0
        %vm402 = vcmp.ne.s32.totalorder %v370, 0
        %vm403 = vcmp.ne.s32.totalorder %v371, 0
        %vm404 = vcmp.ne.s32.totalorder %v372, 0
        %vm405 = vcmp.ne.s32.totalorder %v373, 0
        %vm406 = vcmp.ne.s32.totalorder %v374, 0
        %vm407 = vcmp.ne.s32.totalorder %v375, 0
        %vm408 = vcmp.ne.s32.totalorder %v376, 0
        %vm409 = vcmp.ne.s32.totalorder %v377, 0
        %vm410 = vcmp.ne.s32.totalorder %v378, 0
        %vm411 = vcmp.ne.s32.totalorder %v379, 0
        %vm412 = vcmp.ne.s32.totalorder %v380, 0
        %vm413 = vcmp.ne.s32.totalorder %v381, 0
        %vm414 = vcmp.ne.s32.totalorder %v382, 0
        %vm415 = vcmp.ne.s32.totalorder %v383, 0
        %vm416 = vcmp.ne.s32.totalorder %v384, 0
        %vm417 = vcmp.ne.s32.totalorder %v385, 0
        %vm418 = vcmp.ne.s32.totalorder %v386, 0
        %vm419 = vcmp.ne.s32.totalorder %v387, 0
        %vm420 = vcmp.ne.s32.totalorder %v388, 0
        %vm421 = vcmp.ne.s32.totalorder %v389, 0
        %vm422 = vcmp.ne.s32.totalorder %v390, 0
        %vm423 = vcmp.ne.s32.totalorder %v391, 0
        %vm424 = vcmp.ne.s32.totalorder %v392, 0
        %v425 = vsel %vm393, 1, 0
        %v426 = vsel %vm394, 1, 0
        %v427 = vsel %vm395, 1, 0
        %v428 = vsel %vm396, 1, 0
        %v429 = vsel %vm397, 1, 0
        %v430 = vsel %vm398, 1, 0
        %v431 = vsel %vm399, 1, 0
        %v432 = vsel %vm400, 1, 0
        %v433 = vsel %vm401, 1, 0
        %v434 = vsel %vm402, 1, 0
        %v435 = vsel %vm403, 1, 0
        %v436 = vsel %vm404, 1, 0
        %v437 = vsel %vm405, 1, 0
        %v438 = vsel %vm406, 1, 0
        %v439 = vsel %vm407, 1, 0
        %v440 = vsel %vm408, 1, 0
        %v441 = vsel %vm409, 1, 0
        %v442 = vsel %vm410, 1, 0
        %v443 = vsel %vm411, 1, 0
        %v444 = vsel %vm412, 1, 0
        %v445 = vsel %vm413, 1, 0
        %v446 = vsel %vm414, 1, 0
        %v447 = vsel %vm415, 1, 0
        %v448 = vsel %vm416, 1, 0
        %v449 = vsel %vm417, 1, 0
        %v450 = vsel %vm418, 1, 0
        %v451 = vsel %vm419, 1, 0
        %v452 = vsel %vm420, 1, 0
        %v453 = vsel %vm421, 1, 0
        %v454 = vsel %vm422, 1, 0
        %v455 = vsel %vm423, 1, 0
        %v456 = vsel %vm424, 1, 0
        %v457 = vcvt.s32.f32 %v425
        %v458 = vcvt.s32.f32 %v426
        %v459 = vcvt.s32.f32 %v427
        %v460 = vcvt.s32.f32 %v428
        %v461 = vcvt.s32.f32 %v429
        %v462 = vcvt.s32.f32 %v430
        %v463 = vcvt.s32.f32 %v431
        %v464 = vcvt.s32.f32 %v432
        %v465 = vcvt.s32.f32 %v433
        %v466 = vcvt.s32.f32 %v434
        %v467 = vcvt.s32.f32 %v435
        %v468 = vcvt.s32.f32 %v436
        %v469 = vcvt.s32.f32 %v437
        %v470 = vcvt.s32.f32 %v438
        %v471 = vcvt.s32.f32 %v439
        %v472 = vcvt.s32.f32 %v440
        %v473 = vcvt.s32.f32 %v441
        %v474 = vcvt.s32.f32 %v442
        %v475 = vcvt.s32.f32 %v443
        %v476 = vcvt.s32.f32 %v444
        %v477 = vcvt.s32.f32 %v445
        %v478 = vcvt.s32.f32 %v446
        %v479 = vcvt.s32.f32 %v447
        %v480 = vcvt.s32.f32 %v448
        %v481 = vcvt.s32.f32 %v449
        %v482 = vcvt.s32.f32 %v450
        %v483 = vcvt.s32.f32 %v451
        %v484 = vcvt.s32.f32 %v452
        %v485 = vcvt.s32.f32 %v453
        %v486 = vcvt.s32.f32 %v454
        %v487 = vcvt.s32.f32 %v455
        %v488 = vcvt.s32.f32 %v456
        %v489 = vpack.c.bf16 %v459, %v457
        %v490 = vpack.c.bf16 %v460, %v458
        %v491 = vpack.c.bf16 %v463, %v461
        %v492 = vpack.c.bf16 %v464, %v462
        %v493 = vpack.c.bf16 %v467, %v465
        %v494 = vpack.c.bf16 %v468, %v466
        %v495 = vpack.c.bf16 %v471, %v469
        %v496 = vpack.c.bf16 %v472, %v470
        %v497 = vpack.c.bf16 %v475, %v473
        %v498 = vpack.c.bf16 %v476, %v474
        %v499 = vpack.c.bf16 %v479, %v477
        %v500 = vpack.c.bf16 %v480, %v478
        %v501 = vpack.c.bf16 %v483, %v481
        %v502 = vpack.c.bf16 %v484, %v482
        %v503 = vpack.c.bf16 %v487, %v485
        %v504 = vpack.c.bf16 %v488, %v486
        %505 = vst [vmem:[#allocation2] sm:$0xff] %v489
        %506 = vst [vmem:[#allocation2 + $0x8] sm:$0xff] %v490
        %507 = vst [vmem:[#allocation2 + $0x30] sm:$0xff] %v491
        %508 = vst [vmem:[#allocation2 + $0x38] sm:$0xff] %v492
        %509 = vst [vmem:[#allocation2 + $0x60] sm:$0xff] %v493
        %510 = vst [vmem:[#allocation2 + $0x68] sm:$0xff] %v494
        %511 = vst [vmem:[#allocation2 + $0x90] sm:$0xff] %v495
        %512 = vst [vmem:[#allocation2 + $0x98] sm:$0xff] %v496
        %513 = vst [vmem:[#allocation2 + $0xc0] sm:$0xff] %v497
        %514 = vst [vmem:[#allocation2 + $0xc8] sm:$0xff] %v498
        %515 = vst [vmem:[#allocation2 + $0xf0] sm:$0xff] %v499
        %516 = vst [vmem:[#allocation2 + $0xf8] sm:$0xff] %v500
        %517 = vst [vmem:[#allocation2 + $0x120] sm:$0xff] %v501
        %518 = vst [vmem:[#allocation2 + $0x128] sm:$0xff] %v502
        %519 = vst [vmem:[#allocation2 + $0x150] sm:$0xff] %v503
        %520 = vst [vmem:[#allocation2 + $0x158] sm:$0xff] %v504
        %521 = vset.pattern.permute.xlu0 1
        %522 = vperm.xlu0 %521, %v201
        %v523 = vpop.permute.xlu0 %522
        %525 = vset.pattern.permute.xlu0 1
        %526 = vperm.xlu0 %525, %v202
        %v527 = vpop.permute.xlu0 %526
        %529 = vset.pattern.permute.xlu0 1
        %530 = vperm.xlu0 %529, %v203
        %v531 = vpop.permute.xlu0 %530
        %533 = vset.pattern.permute.xlu0 1
        %534 = vperm.xlu0 %533, %v204
        %v535 = vpop.permute.xlu0 %534
        %537 = vset.pattern.permute.xlu0 1
        %538 = vperm.xlu0 %537, %v205
        %v539 = vpop.permute.xlu0 %538
        %541 = vset.pattern.permute.xlu0 1
        %542 = vperm.xlu0 %541, %v206
        %v543 = vpop.permute.xlu0 %542
        %545 = vset.pattern.permute.xlu0 1
        %546 = vperm.xlu0 %545, %v207
        %v547 = vpop.permute.xlu0 %546
        %549 = vset.pattern.permute.xlu0 1
        %550 = vperm.xlu0 %549, %v208
        %v551 = vpop.permute.xlu0 %550
        %vm553 = vcmp.eq.bf16.partialorder %v167, %v523
        %vm554 = vcmp.eq.bf16.partialorder %v168, %v523
        %vm555 = vcmp.eq.bf16.partialorder %v167, %v527
        %vm556 = vcmp.eq.bf16.partialorder %v168, %v527
        %vm557 = vcmp.eq.bf16.partialorder %v167, %v531
        %vm558 = vcmp.eq.bf16.partialorder %v168, %v531
        %vm559 = vcmp.eq.bf16.partialorder %v167, %v535
        %vm560 = vcmp.eq.bf16.partialorder %v168, %v535
        %vm561 = vcmp.eq.bf16.partialorder %v167, %v539
        %vm562 = vcmp.eq.bf16.partialorder %v168, %v539
        %vm563 = vcmp.eq.bf16.partialorder %v167, %v543
        %vm564 = vcmp.eq.bf16.partialorder %v168, %v543
        %vm565 = vcmp.eq.bf16.partialorder %v167, %v547
        %vm566 = vcmp.eq.bf16.partialorder %v168, %v547
        %vm567 = vcmp.eq.bf16.partialorder %v167, %v551
        %vm568 = vcmp.eq.bf16.partialorder %v168, %v551
        %v569 = vsel %vm553, 65537, 0
        %v570 = vsel %vm554, 65537, 0
        %v571 = vsel %vm555, 65537, 0
        %v572 = vsel %vm556, 65537, 0
        %v573 = vsel %vm557, 65537, 0
        %v574 = vsel %vm558, 65537, 0
        %v575 = vsel %vm559, 65537, 0
        %v576 = vsel %vm560, 65537, 0
        %v577 = vsel %vm561, 65537, 0
        %v578 = vsel %vm562, 65537, 0
        %v579 = vsel %vm563, 65537, 0
        %v580 = vsel %vm564, 65537, 0
        %v581 = vsel %vm565, 65537, 0
        %v582 = vsel %vm566, 65537, 0
        %v583 = vsel %vm567, 65537, 0
        %v584 = vsel %vm568, 65537, 0
        %v585 = vunpack.c.l.b16 %v569
        %v586 = vunpack.c.l.b16 %v570
        %v587 = vunpack.c.h.b16 %v569
        %v588 = vunpack.c.h.b16 %v570
        %v589 = vunpack.c.l.b16 %v571
        %v590 = vunpack.c.l.b16 %v572
        %v591 = vunpack.c.h.b16 %v571
        %v592 = vunpack.c.h.b16 %v572
        %v593 = vunpack.c.l.b16 %v573
        %v594 = vunpack.c.l.b16 %v574
        %v595 = vunpack.c.h.b16 %v573
        %v596 = vunpack.c.h.b16 %v574
        %v597 = vunpack.c.l.b16 %v575
        %v598 = vunpack.c.l.b16 %v576
        %v599 = vunpack.c.h.b16 %v575
        %v600 = vunpack.c.h.b16 %v576
        %v601 = vunpack.c.l.b16 %v577
        %v602 = vunpack.c.l.b16 %v578
        %v603 = vunpack.c.h.b16 %v577
        %v604 = vunpack.c.h.b16 %v578
        %v605 = vunpack.c.l.b16 %v579
        %v606 = vunpack.c.l.b16 %v580
        %v607 = vunpack.c.h.b16 %v579
        %v608 = vunpack.c.h.b16 %v580
        %v609 = vunpack.c.l.b16 %v581
        %v610 = vunpack.c.l.b16 %v582
        %v611 = vunpack.c.h.b16 %v581
        %v612 = vunpack.c.h.b16 %v582
        %v613 = vunpack.c.l.b16 %v583
        %v614 = vunpack.c.l.b16 %v584
        %v615 = vunpack.c.h.b16 %v583
        %v616 = vunpack.c.h.b16 %v584
        %v617 = vpack.c.b16 %v586, %v585
        %v618 = vpack.c.b16 %v588, %v587
        %v619 = vpack.c.b16 %v590, %v589
        %v620 = vpack.c.b16 %v592, %v591
        %v621 = vpack.c.b16 %v594, %v593
        %v622 = vpack.c.b16 %v596, %v595
        %v623 = vpack.c.b16 %v598, %v597
        %v624 = vpack.c.b16 %v600, %v599
        %v625 = vpack.c.b16 %v602, %v601
        %v626 = vpack.c.b16 %v604, %v603
        %v627 = vpack.c.b16 %v606, %v605
        %v628 = vpack.c.b16 %v608, %v607
        %v629 = vpack.c.b16 %v610, %v609
        %v630 = vpack.c.b16 %v612, %v611
        %v631 = vpack.c.b16 %v614, %v613
        %v632 = vpack.c.b16 %v616, %v615
        %vm633 = vcmp.ne.s16.totalorder %v617, 0
        %vm634 = vcmp.ne.s16.totalorder %v618, 0
        %vm635 = vcmp.ne.s16.totalorder %v619, 0
        %vm636 = vcmp.ne.s16.totalorder %v620, 0
        %vm637 = vcmp.ne.s16.totalorder %v621, 0
        %vm638 = vcmp.ne.s16.totalorder %v622, 0
        %vm639 = vcmp.ne.s16.totalorder %v623, 0
        %vm640 = vcmp.ne.s16.totalorder %v624, 0
        %vm641 = vcmp.ne.s16.totalorder %v625, 0
        %vm642 = vcmp.ne.s16.totalorder %v626, 0
        %vm643 = vcmp.ne.s16.totalorder %v627, 0
        %vm644 = vcmp.ne.s16.totalorder %v628, 0
        %vm645 = vcmp.ne.s16.totalorder %v629, 0
        %vm646 = vcmp.ne.s16.totalorder %v630, 0
        %vm647 = vcmp.ne.s16.totalorder %v631, 0
        %vm648 = vcmp.ne.s16.totalorder %v632, 0
        %v649 = vsel %vm633, 65537, 0
        %v650 = vsel %vm634, 65537, 0
        %v651 = vsel %vm635, 65537, 0
        %v652 = vsel %vm636, 65537, 0
        %v653 = vsel %vm637, 65537, 0
        %v654 = vsel %vm638, 65537, 0
        %v655 = vsel %vm639, 65537, 0
        %v656 = vsel %vm640, 65537, 0
        %v657 = vsel %vm641, 65537, 0
        %v658 = vsel %vm642, 65537, 0
        %v659 = vsel %vm643, 65537, 0
        %v660 = vsel %vm644, 65537, 0
        %v661 = vsel %vm645, 65537, 0
        %v662 = vsel %vm646, 65537, 0
        %v663 = vsel %vm647, 65537, 0
        %v664 = vsel %vm648, 65537, 0
        %v665 = vunpack.c.l.b16 %v649
        %v666 = vunpack.c.h.b16 %v649
        %v667 = vunpack.c.l.b16 %v650
        %v668 = vunpack.c.h.b16 %v650
        %v669 = vunpack.c.l.b16 %v651
        %v670 = vunpack.c.h.b16 %v651
        %v671 = vunpack.c.l.b16 %v652
        %v672 = vunpack.c.h.b16 %v652
        %v673 = vunpack.c.l.b16 %v653
        %v674 = vunpack.c.h.b16 %v653
        %v675 = vunpack.c.l.b16 %v654
        %v676 = vunpack.c.h.b16 %v654
        %v677 = vunpack.c.l.b16 %v655
        %v678 = vunpack.c.h.b16 %v655
        %v679 = vunpack.c.l.b16 %v656
        %v680 = vunpack.c.h.b16 %v656
        %v681 = vunpack.c.l.b16 %v657
        %v682 = vunpack.c.h.b16 %v657
        %v683 = vunpack.c.l.b16 %v658
        %v684 = vunpack.c.h.b16 %v658
        %v685 = vunpack.c.l.b16 %v659
        %v686 = vunpack.c.h.b16 %v659
        %v687 = vunpack.c.l.b16 %v660
        %v688 = vunpack.c.h.b16 %v660
        %v689 = vunpack.c.l.b16 %v661
        %v690 = vunpack.c.h.b16 %v661
        %v691 = vunpack.c.l.b16 %v662
        %v692 = vunpack.c.h.b16 %v662
        %v693 = vunpack.c.l.b16 %v663
        %v694 = vunpack.c.h.b16 %v663
        %v695 = vunpack.c.l.b16 %v664
        %v696 = vunpack.c.h.b16 %v664
        %vm697 = vcmp.ne.s32.totalorder %v665, 0
        %vm698 = vcmp.ne.s32.totalorder %v666, 0
        %vm699 = vcmp.ne.s32.totalorder %v667, 0
        %vm700 = vcmp.ne.s32.totalorder %v668, 0
        %vm701 = vcmp.ne.s32.totalorder %v669, 0
        %vm702 = vcmp.ne.s32.totalorder %v670, 0
        %vm703 = vcmp.ne.s32.totalorder %v671, 0
        %vm704 = vcmp.ne.s32.totalorder %v672, 0
        %vm705 = vcmp.ne.s32.totalorder %v673, 0
        %vm706 = vcmp.ne.s32.totalorder %v674, 0
        %vm707 = vcmp.ne.s32.totalorder %v675, 0
        %vm708 = vcmp.ne.s32.totalorder %v676, 0
        %vm709 = vcmp.ne.s32.totalorder %v677, 0
        %vm710 = vcmp.ne.s32.totalorder %v678, 0
        %vm711 = vcmp.ne.s32.totalorder %v679, 0
        %vm712 = vcmp.ne.s32.totalorder %v680, 0
        %vm713 = vcmp.ne.s32.totalorder %v681, 0
        %vm714 = vcmp.ne.s32.totalorder %v682, 0
        %vm715 = vcmp.ne.s32.totalorder %v683, 0
        %vm716 = vcmp.ne.s32.totalorder %v684, 0
        %vm717 = vcmp.ne.s32.totalorder %v685, 0
        %vm718 = vcmp.ne.s32.totalorder %v686, 0
        %vm719 = vcmp.ne.s32.totalorder %v687, 0
        %vm720 = vcmp.ne.s32.totalorder %v688, 0
        %vm721 = vcmp.ne.s32.totalorder %v689, 0
        %vm722 = vcmp.ne.s32.totalorder %v690, 0
        %vm723 = vcmp.ne.s32.totalorder %v691, 0
        %vm724 = vcmp.ne.s32.totalorder %v692, 0
        %vm725 = vcmp.ne.s32.totalorder %v693, 0
        %vm726 = vcmp.ne.s32.totalorder %v694, 0
        %vm727 = vcmp.ne.s32.totalorder %v695, 0
        %vm728 = vcmp.ne.s32.totalorder %v696, 0
        %v729 = vsel %vm697, 1, 0
        %v730 = vsel %vm698, 1, 0
        %v731 = vsel %vm699, 1, 0
        %v732 = vsel %vm700, 1, 0
        %v733 = vsel %vm701, 1, 0
        %v734 = vsel %vm702, 1, 0
        %v735 = vsel %vm703, 1, 0
        %v736 = vsel %vm704, 1, 0
        %v737 = vsel %vm705, 1, 0
        %v738 = vsel %vm706, 1, 0
        %v739 = vsel %vm707, 1, 0
        %v740 = vsel %vm708, 1, 0
        %v741 = vsel %vm709, 1, 0
        %v742 = vsel %vm710, 1, 0
        %v743 = vsel %vm711, 1, 0
        %v744 = vsel %vm712, 1, 0
        %v745 = vsel %vm713, 1, 0
        %v746 = vsel %vm714, 1, 0
        %v747 = vsel %vm715, 1, 0
        %v748 = vsel %vm716, 1, 0
        %v749 = vsel %vm717, 1, 0
        %v750 = vsel %vm718, 1, 0
        %v751 = vsel %vm719, 1, 0
        %v752 = vsel %vm720, 1, 0
        %v753 = vsel %vm721, 1, 0
        %v754 = vsel %vm722, 1, 0
        %v755 = vsel %vm723, 1, 0
        %v756 = vsel %vm724, 1, 0
        %v757 = vsel %vm725, 1, 0
        %v758 = vsel %vm726, 1, 0
        %v759 = vsel %vm727, 1, 0
        %v760 = vsel %vm728, 1, 0
        %v761 = vcvt.s32.f32 %v729
        %v762 = vcvt.s32.f32 %v730
        %v763 = vcvt.s32.f32 %v731
        %v764 = vcvt.s32.f32 %v732
        %v765 = vcvt.s32.f32 %v733
        %v766 = vcvt.s32.f32 %v734
        %v767 = vcvt.s32.f32 %v735
        %v768 = vcvt.s32.f32 %v736
        %v769 = vcvt.s32.f32 %v737
        %v770 = vcvt.s32.f32 %v738
        %v771 = vcvt.s32.f32 %v739
        %v772 = vcvt.s32.f32 %v740
        %v773 = vcvt.s32.f32 %v741
        %v774 = vcvt.s32.f32 %v742
        %v775 = vcvt.s32.f32 %v743
        %v776 = vcvt.s32.f32 %v744
        %v777 = vcvt.s32.f32 %v745
        %v778 = vcvt.s32.f32 %v746
        %v779 = vcvt.s32.f32 %v747
        %v780 = vcvt.s32.f32 %v748
        %v781 = vcvt.s32.f32 %v749
        %v782 = vcvt.s32.f32 %v750
        %v783 = vcvt.s32.f32 %v751
        %v784 = vcvt.s32.f32 %v752
        %v785 = vcvt.s32.f32 %v753
        %v786 = vcvt.s32.f32 %v754
        %v787 = vcvt.s32.f32 %v755
        %v788 = vcvt.s32.f32 %v756
        %v789 = vcvt.s32.f32 %v757
        %v790 = vcvt.s32.f32 %v758
        %v791 = vcvt.s32.f32 %v759
        %v792 = vcvt.s32.f32 %v760
        %v793 = vpack.c.bf16 %v763, %v761
        %v794 = vpack.c.bf16 %v764, %v762
        %v795 = vpack.c.bf16 %v767, %v765
        %v796 = vpack.c.bf16 %v768, %v766
        %v797 = vpack.c.bf16 %v771, %v769
        %v798 = vpack.c.bf16 %v772, %v770
        %v799 = vpack.c.bf16 %v775, %v773
        %v800 = vpack.c.bf16 %v776, %v774
        %v801 = vpack.c.bf16 %v779, %v777
        %v802 = vpack.c.bf16 %v780, %v778
        %v803 = vpack.c.bf16 %v783, %v781
        %v804 = vpack.c.bf16 %v784, %v782
        %v805 = vpack.c.bf16 %v787, %v785
        %v806 = vpack.c.bf16 %v788, %v786
        %v807 = vpack.c.bf16 %v791, %v789
        %v808 = vpack.c.bf16 %v792, %v790
        %809 = vst [vmem:[#allocation2 + $0x10] sm:$0xff] %v793
        %810 = vst [vmem:[#allocation2 + $0x18] sm:$0xff] %v794
        %811 = vst [vmem:[#allocation2 + $0x40] sm:$0xff] %v795
        %812 = vst [vmem:[#allocation2 + $0x48] sm:$0xff] %v796
        %813 = vst [vmem:[#allocation2 + $0x70] sm:$0xff] %v797
        %814 = vst [vmem:[#allocation2 + $0x78] sm:$0xff] %v798
        %815 = vst [vmem:[#allocation2 + $0xa0] sm:$0xff] %v799
        %816 = vst [vmem:[#allocation2 + $0xa8] sm:$0xff] %v800
        %817 = vst [vmem:[#allocation2 + $0xd0] sm:$0xff] %v801
        %818 = vst [vmem:[#allocation2 + $0xd8] sm:$0xff] %v802
        %819 = vst [vmem:[#allocation2 + $0x100] sm:$0xff] %v803
        %820 = vst [vmem:[#allocation2 + $0x108] sm:$0xff] %v804
        %821 = vst [vmem:[#allocation2 + $0x130] sm:$0xff] %v805
        %822 = vst [vmem:[#allocation2 + $0x138] sm:$0xff] %v806
        %823 = vst [vmem:[#allocation2 + $0x160] sm:$0xff] %v807
        %824 = vst [vmem:[#allocation2 + $0x168] sm:$0xff] %v808
        %825 = vset.pattern.permute.xlu0 2
        %826 = vperm.xlu0 %825, %v201
        %v827 = vpop.permute.xlu0 %826
        %829 = vset.pattern.permute.xlu0 2
        %830 = vperm.xlu0 %829, %v202
        %v831 = vpop.permute.xlu0 %830
        %833 = vset.pattern.permute.xlu0 2
        %834 = vperm.xlu0 %833, %v203
        %v835 = vpop.permute.xlu0 %834
        %837 = vset.pattern.permute.xlu0 2
        %838 = vperm.xlu0 %837, %v204
        %v839 = vpop.permute.xlu0 %838
        %841 = vset.pattern.permute.xlu0 2
        %842 = vperm.xlu0 %841, %v205
        %v843 = vpop.permute.xlu0 %842
        %845 = vset.pattern.permute.xlu0 2
        %846 = vperm.xlu0 %845, %v206
        %v847 = vpop.permute.xlu0 %846
        %849 = vset.pattern.permute.xlu0 2
        %850 = vperm.xlu0 %849, %v207
        %v851 = vpop.permute.xlu0 %850
        %853 = vset.pattern.permute.xlu0 2
        %854 = vperm.xlu0 %853, %v208
        %v855 = vpop.permute.xlu0 %854
        %vm857 = vcmp.eq.bf16.partialorder %v167, %v827
        %vm858 = vcmp.eq.bf16.partialorder %v168, %v827
        %vm859 = vcmp.eq.bf16.partialorder %v167, %v831
        %vm860 = vcmp.eq.bf16.partialorder %v168, %v831
        %vm861 = vcmp.eq.bf16.partialorder %v167, %v835
        %vm862 = vcmp.eq.bf16.partialorder %v168, %v835
        %vm863 = vcmp.eq.bf16.partialorder %v167, %v839
        %vm864 = vcmp.eq.bf16.partialorder %v168, %v839
        %vm865 = vcmp.eq.bf16.partialorder %v167, %v843
        %vm866 = vcmp.eq.bf16.partialorder %v168, %v843
        %vm867 = vcmp.eq.bf16.partialorder %v167, %v847
        %vm868 = vcmp.eq.bf16.partialorder %v168, %v847
        %vm869 = vcmp.eq.bf16.partialorder %v167, %v851
        %vm870 = vcmp.eq.bf16.partialorder %v168, %v851
        %vm871 = vcmp.eq.bf16.partialorder %v167, %v855
        %vm872 = vcmp.eq.bf16.partialorder %v168, %v855
        %v873 = vsel %vm857, 65537, 0
        %v874 = vsel %vm858, 65537, 0
        %v875 = vsel %vm859, 65537, 0
        %v876 = vsel %vm860, 65537, 0
        %v877 = vsel %vm861, 65537, 0
        %v878 = vsel %vm862, 65537, 0
        %v879 = vsel %vm863, 65537, 0
        %v880 = vsel %vm864, 65537, 0
        %v881 = vsel %vm865, 65537, 0
        %v882 = vsel %vm866, 65537, 0
        %v883 = vsel %vm867, 65537, 0
        %v884 = vsel %vm868, 65537, 0
        %v885 = vsel %vm869, 65537, 0
        %v886 = vsel %vm870, 65537, 0
        %v887 = vsel %vm871, 65537, 0
        %v888 = vsel %vm872, 65537, 0
        %v889 = vunpack.c.l.b16 %v873
        %v890 = vunpack.c.l.b16 %v874
        %v891 = vunpack.c.h.b16 %v873
        %v892 = vunpack.c.h.b16 %v874
        %v893 = vunpack.c.l.b16 %v875
        %v894 = vunpack.c.l.b16 %v876
        %v895 = vunpack.c.h.b16 %v875
        %v896 = vunpack.c.h.b16 %v876
        %v897 = vunpack.c.l.b16 %v877
        %v898 = vunpack.c.l.b16 %v878
        %v899 = vunpack.c.h.b16 %v877
        %v900 = vunpack.c.h.b16 %v878
        %v901 = vunpack.c.l.b16 %v879
        %v902 = vunpack.c.l.b16 %v880
        %v903 = vunpack.c.h.b16 %v879
        %v904 = vunpack.c.h.b16 %v880
        %v905 = vunpack.c.l.b16 %v881
        %v906 = vunpack.c.l.b16 %v882
        %v907 = vunpack.c.h.b16 %v881
        %v908 = vunpack.c.h.b16 %v882
        %v909 = vunpack.c.l.b16 %v883
        %v910 = vunpack.c.l.b16 %v884
        %v911 = vunpack.c.h.b16 %v883
        %v912 = vunpack.c.h.b16 %v884
        %v913 = vunpack.c.l.b16 %v885
        %v914 = vunpack.c.l.b16 %v886
        %v915 = vunpack.c.h.b16 %v885
        %v916 = vunpack.c.h.b16 %v886
        %v917 = vunpack.c.l.b16 %v887
        %v918 = vunpack.c.l.b16 %v888
        %v919 = vunpack.c.h.b16 %v887
        %v920 = vunpack.c.h.b16 %v888
        %v921 = vpack.c.b16 %v890, %v889
        %v922 = vpack.c.b16 %v892, %v891
        %v923 = vpack.c.b16 %v894, %v893
        %v924 = vpack.c.b16 %v896, %v895
        %v925 = vpack.c.b16 %v898, %v897
        %v926 = vpack.c.b16 %v900, %v899
        %v927 = vpack.c.b16 %v902, %v901
        %v928 = vpack.c.b16 %v904, %v903
        %v929 = vpack.c.b16 %v906, %v905
        %v930 = vpack.c.b16 %v908, %v907
        %v931 = vpack.c.b16 %v910, %v909
        %v932 = vpack.c.b16 %v912, %v911
        %v933 = vpack.c.b16 %v914, %v913
        %v934 = vpack.c.b16 %v916, %v915
        %v935 = vpack.c.b16 %v918, %v917
        %v936 = vpack.c.b16 %v920, %v919
        %vm937 = vcmp.ne.s16.totalorder %v921, 0
        %vm938 = vcmp.ne.s16.totalorder %v922, 0
        %vm939 = vcmp.ne.s16.totalorder %v923, 0
        %vm940 = vcmp.ne.s16.totalorder %v924, 0
        %vm941 = vcmp.ne.s16.totalorder %v925, 0
        %vm942 = vcmp.ne.s16.totalorder %v926, 0
        %vm943 = vcmp.ne.s16.totalorder %v927, 0
        %vm944 = vcmp.ne.s16.totalorder %v928, 0
        %vm945 = vcmp.ne.s16.totalorder %v929, 0
        %vm946 = vcmp.ne.s16.totalorder %v930, 0
        %vm947 = vcmp.ne.s16.totalorder %v931, 0
        %vm948 = vcmp.ne.s16.totalorder %v932, 0
        %vm949 = vcmp.ne.s16.totalorder %v933, 0
        %vm950 = vcmp.ne.s16.totalorder %v934, 0
        %vm951 = vcmp.ne.s16.totalorder %v935, 0
        %vm952 = vcmp.ne.s16.totalorder %v936, 0
        %v953 = vsel %vm937, 65537, 0
        %v954 = vsel %vm938, 65537, 0
        %v955 = vsel %vm939, 65537, 0
        %v956 = vsel %vm940, 65537, 0
        %v957 = vsel %vm941, 65537, 0
        %v958 = vsel %vm942, 65537, 0
        %v959 = vsel %vm943, 65537, 0
        %v960 = vsel %vm944, 65537, 0
        %v961 = vsel %vm945, 65537, 0
        %v962 = vsel %vm946, 65537, 0
        %v963 = vsel %vm947, 65537, 0
        %v964 = vsel %vm948, 65537, 0
        %v965 = vsel %vm949, 65537, 0
        %v966 = vsel %vm950, 65537, 0
        %v967 = vsel %vm951, 65537, 0
        %v968 = vsel %vm952, 65537, 0
        %v969 = vunpack.c.l.b16 %v953
        %v970 = vunpack.c.h.b16 %v953
        %v971 = vunpack.c.l.b16 %v954
        %v972 = vunpack.c.h.b16 %v954
        %v973 = vunpack.c.l.b16 %v955
        %v974 = vunpack.c.h.b16 %v955
        %v975 = vunpack.c.l.b16 %v956
        %v976 = vunpack.c.h.b16 %v956
        %v977 = vunpack.c.l.b16 %v957
        %v978 = vunpack.c.h.b16 %v957
        %v979 = vunpack.c.l.b16 %v958
        %v980 = vunpack.c.h.b16 %v958
        %v981 = vunpack.c.l.b16 %v959
        %v982 = vunpack.c.h.b16 %v959
        %v983 = vunpack.c.l.b16 %v960
        %v984 = vunpack.c.h.b16 %v960
        %v985 = vunpack.c.l.b16 %v961
        %v986 = vunpack.c.h.b16 %v961
        %v987 = vunpack.c.l.b16 %v962
        %v988 = vunpack.c.h.b16 %v962
        %v989 = vunpack.c.l.b16 %v963
        %v990 = vunpack.c.h.b16 %v963
        %v991 = vunpack.c.l.b16 %v964
        %v992 = vunpack.c.h.b16 %v964
        %v993 = vunpack.c.l.b16 %v965
        %v994 = vunpack.c.h.b16 %v965
        %v995 = vunpack.c.l.b16 %v966
        %v996 = vunpack.c.h.b16 %v966
        %v997 = vunpack.c.l.b16 %v967
        %v998 = vunpack.c.h.b16 %v967
        %v999 = vunpack.c.l.b16 %v968
        %v1000 = vunpack.c.h.b16 %v968
        %vm1001 = vcmp.ne.s32.totalorder %v969, 0
        %vm1002 = vcmp.ne.s32.totalorder %v970, 0
        %vm1003 = vcmp.ne.s32.totalorder %v971, 0
        %vm1004 = vcmp.ne.s32.totalorder %v972, 0
        %vm1005 = vcmp.ne.s32.totalorder %v973, 0
        %vm1006 = vcmp.ne.s32.totalorder %v974, 0
        %vm1007 = vcmp.ne.s32.totalorder %v975, 0
        %vm1008 = vcmp.ne.s32.totalorder %v976, 0
        %vm1009 = vcmp.ne.s32.totalorder %v977, 0
        %vm1010 = vcmp.ne.s32.totalorder %v978, 0
        %vm1011 = vcmp.ne.s32.totalorder %v979, 0
        %vm1012 = vcmp.ne.s32.totalorder %v980, 0
        %vm1013 = vcmp.ne.s32.totalorder %v981, 0
        %vm1014 = vcmp.ne.s32.totalorder %v982, 0
        %vm1015 = vcmp.ne.s32.totalorder %v983, 0
        %vm1016 = vcmp.ne.s32.totalorder %v984, 0
        %vm1017 = vcmp.ne.s32.totalorder %v985, 0
        %vm1018 = vcmp.ne.s32.totalorder %v986, 0
        %vm1019 = vcmp.ne.s32.totalorder %v987, 0
        %vm1020 = vcmp.ne.s32.totalorder %v988, 0
        %vm1021 = vcmp.ne.s32.totalorder %v989, 0
        %vm1022 = vcmp.ne.s32.totalorder %v990, 0
        %vm1023 = vcmp.ne.s32.totalorder %v991, 0
        %vm1024 = vcmp.ne.s32.totalorder %v992, 0
        %vm1025 = vcmp.ne.s32.totalorder %v993, 0
        %vm1026 = vcmp.ne.s32.totalorder %v994, 0
        %vm1027 = vcmp.ne.s32.totalorder %v995, 0
        %vm1028 = vcmp.ne.s32.totalorder %v996, 0
        %vm1029 = vcmp.ne.s32.totalorder %v997, 0
        %vm1030 = vcmp.ne.s32.totalorder %v998, 0
        %vm1031 = vcmp.ne.s32.totalorder %v999, 0
        %vm1032 = vcmp.ne.s32.totalorder %v1000, 0
        %v1033 = vsel %vm1001, 1, 0
        %v1034 = vsel %vm1002, 1, 0
        %v1035 = vsel %vm1003, 1, 0
        %v1036 = vsel %vm1004, 1, 0
        %v1037 = vsel %vm1005, 1, 0
        %v1038 = vsel %vm1006, 1, 0
        %v1039 = vsel %vm1007, 1, 0
        %v1040 = vsel %vm1008, 1, 0
        %v1041 = vsel %vm1009, 1, 0
        %v1042 = vsel %vm1010, 1, 0
        %v1043 = vsel %vm1011, 1, 0
        %v1044 = vsel %vm1012, 1, 0
        %v1045 = vsel %vm1013, 1, 0
        %v1046 = vsel %vm1014, 1, 0
        %v1047 = vsel %vm1015, 1, 0
        %v1048 = vsel %vm1016, 1, 0
        %v1049 = vsel %vm1017, 1, 0
        %v1050 = vsel %vm1018, 1, 0
        %v1051 = vsel %vm1019, 1, 0
        %v1052 = vsel %vm1020, 1, 0
        %v1053 = vsel %vm1021, 1, 0
        %v1054 = vsel %vm1022, 1, 0
        %v1055 = vsel %vm1023, 1, 0
        %v1056 = vsel %vm1024, 1, 0
        %v1057 = vsel %vm1025, 1, 0
        %v1058 = vsel %vm1026, 1, 0
        %v1059 = vsel %vm1027, 1, 0
        %v1060 = vsel %vm1028, 1, 0
        %v1061 = vsel %vm1029, 1, 0
        %v1062 = vsel %vm1030, 1, 0
        %v1063 = vsel %vm1031, 1, 0
        %v1064 = vsel %vm1032, 1, 0
        %v1065 = vcvt.s32.f32 %v1033
        %v1066 = vcvt.s32.f32 %v1034
        %v1067 = vcvt.s32.f32 %v1035
        %v1068 = vcvt.s32.f32 %v1036
        %v1069 = vcvt.s32.f32 %v1037
        %v1070 = vcvt.s32.f32 %v1038
        %v1071 = vcvt.s32.f32 %v1039
        %v1072 = vcvt.s32.f32 %v1040
        %v1073 = vcvt.s32.f32 %v1041
        %v1074 = vcvt.s32.f32 %v1042
        %v1075 = vcvt.s32.f32 %v1043
        %v1076 = vcvt.s32.f32 %v1044
        %v1077 = vcvt.s32.f32 %v1045
        %v1078 = vcvt.s32.f32 %v1046
        %v1079 = vcvt.s32.f32 %v1047
        %v1080 = vcvt.s32.f32 %v1048
        %v1081 = vcvt.s32.f32 %v1049
        %v1082 = vcvt.s32.f32 %v1050
        %v1083 = vcvt.s32.f32 %v1051
        %v1084 = vcvt.s32.f32 %v1052
        %v1085 = vcvt.s32.f32 %v1053
        %v1086 = vcvt.s32.f32 %v1054
        %v1087 = vcvt.s32.f32 %v1055
        %v1088 = vcvt.s32.f32 %v1056
        %v1089 = vcvt.s32.f32 %v1057
        %v1090 = vcvt.s32.f32 %v1058
        %v1091 = vcvt.s32.f32 %v1059
        %v1092 = vcvt.s32.f32 %v1060
        %v1093 = vcvt.s32.f32 %v1061
        %v1094 = vcvt.s32.f32 %v1062
        %v1095 = vcvt.s32.f32 %v1063
        %v1096 = vcvt.s32.f32 %v1064
        %v1097 = vpack.c.bf16 %v1067, %v1065
        %v1098 = vpack.c.bf16 %v1068, %v1066
        %v1099 = vpack.c.bf16 %v1071, %v1069
        %v1100 = vpack.c.bf16 %v1072, %v1070
        %v1101 = vpack.c.bf16 %v1075, %v1073
        %v1102 = vpack.c.bf16 %v1076, %v1074
        %v1103 = vpack.c.bf16 %v1079, %v1077
        %v1104 = vpack.c.bf16 %v1080, %v1078
        %v1105 = vpack.c.bf16 %v1083, %v1081
        %v1106 = vpack.c.bf16 %v1084, %v1082
        %v1107 = vpack.c.bf16 %v1087, %v1085
        %v1108 = vpack.c.bf16 %v1088, %v1086
        %v1109 = vpack.c.bf16 %v1091, %v1089
        %v1110 = vpack.c.bf16 %v1092, %v1090
        %v1111 = vpack.c.bf16 %v1095, %v1093
        %v1112 = vpack.c.bf16 %v1096, %v1094
        %1113 = vst [vmem:[#allocation2 + $0x20] sm:$0xff] %v1097
        %1114 = vst [vmem:[#allocation2 + $0x28] sm:$0xff] %v1098
        %1115 = vst [vmem:[#allocation2 + $0x50] sm:$0xff] %v1099
        %1116 = vst [vmem:[#allocation2 + $0x58] sm:$0xff] %v1100
        %1117 = vst [vmem:[#allocation2 + $0x80] sm:$0xff] %v1101
        %1118 = vst [vmem:[#allocation2 + $0x88] sm:$0xff] %v1102
        %1119 = vst [vmem:[#allocation2 + $0xb0] sm:$0xff] %v1103
        %1120 = vst [vmem:[#allocation2 + $0xb8] sm:$0xff] %v1104
        %1121 = vst [vmem:[#allocation2 + $0xe0] sm:$0xff] %v1105
        %1122 = vst [vmem:[#allocation2 + $0xe8] sm:$0xff] %v1106
        %1123 = vst [vmem:[#allocation2 + $0x110] sm:$0xff] %v1107
        %1124 = vst [vmem:[#allocation2 + $0x118] sm:$0xff] %v1108
        %1125 = vst [vmem:[#allocation2 + $0x140] sm:$0xff] %v1109
        %1126 = vst [vmem:[#allocation2 + $0x148] sm:$0xff] %v1110
        %1127 = vst [vmem:[#allocation2 + $0x170] sm:$0xff] %v1111
        %1128 = vst [vmem:[#allocation2 + $0x178] sm:$0xff] %v1112
        %v1129 = vld [vmem:[%s158] sm:$0xf]
        %v1130 = vld [vmem:[#allocation2] sm:$0xff]
        %v1131 = vld [vmem:[#allocation2 + $0x8] sm:$0xff]
        %v1132 = vld [vmem:[#allocation2 + $0x10] sm:$0xff]
        %v1133 = vld [vmem:[#allocation2 + $0x18] sm:$0xff]
        %v1134 = vld [vmem:[#allocation2 + $0x20] sm:$0xff]
        %v1135 = vld [vmem:[#allocation2 + $0x28] sm:$0xff]
        %v1136 = vld [vmem:[#allocation2 + $0x30] sm:$0xff]
        %v1137 = vld [vmem:[#allocation2 + $0x38] sm:$0xff]
        %v1138 = vld [vmem:[#allocation2 + $0x40] sm:$0xff]
        %v1139 = vld [vmem:[#allocation2 + $0x48] sm:$0xff]
        %v1140 = vld [vmem:[#allocation2 + $0x50] sm:$0xff]
        %v1141 = vld [vmem:[#allocation2 + $0x58] sm:$0xff]
        %v1142 = vld [vmem:[#allocation2 + $0x60] sm:$0xff]
        %v1143 = vld [vmem:[#allocation2 + $0x68] sm:$0xff]
        %v1144 = vld [vmem:[#allocation2 + $0x70] sm:$0xff]
        %v1145 = vld [vmem:[#allocation2 + $0x78] sm:$0xff]
        %v1146 = vld [vmem:[#allocation2 + $0x80] sm:$0xff]
        %v1147 = vld [vmem:[#allocation2 + $0x88] sm:$0xff]
        %v1148 = vld [vmem:[#allocation2 + $0x90] sm:$0xff]
        %v1149 = vld [vmem:[#allocation2 + $0x98] sm:$0xff]
        %v1150 = vld [vmem:[#allocation2 + $0xa0] sm:$0xff]
        %v1151 = vld [vmem:[#allocation2 + $0xa8] sm:$0xff]
        %v1152 = vld [vmem:[#allocation2 + $0xb0] sm:$0xff]
        %v1153 = vld [vmem:[#allocation2 + $0xb8] sm:$0xff]
        %v1154 = vld [vmem:[#allocation2 + $0xc0] sm:$0xff]
        %v1155 = vld [vmem:[#allocation2 + $0xc8] sm:$0xff]
        %v1156 = vld [vmem:[#allocation2 + $0xd0] sm:$0xff]
        %v1157 = vld [vmem:[#allocation2 + $0xd8] sm:$0xff]
        %v1158 = vld [vmem:[#allocation2 + $0xe0] sm:$0xff]
        %v1159 = vld [vmem:[#allocation2 + $0xe8] sm:$0xff]
        %v1160 = vld [vmem:[#allocation2 + $0xf0] sm:$0xff]
        %v1161 = vld [vmem:[#allocation2 + $0xf8] sm:$0xff]
        %v1162 = vld [vmem:[#allocation2 + $0x100] sm:$0xff]
        %v1163 = vld [vmem:[#allocation2 + $0x108] sm:$0xff]
        %v1164 = vld [vmem:[#allocation2 + $0x110] sm:$0xff]
        %v1165 = vld [vmem:[#allocation2 + $0x118] sm:$0xff]
        %v1166 = vld [vmem:[#allocation2 + $0x120] sm:$0xff]
        %v1167 = vld [vmem:[#allocation2 + $0x128] sm:$0xff]
        %v1168 = vld [vmem:[#allocation2 + $0x130] sm:$0xff]
        %v1169 = vld [vmem:[#allocation2 + $0x138] sm:$0xff]
        %v1170 = vld [vmem:[#allocation2 + $0x140] sm:$0xff]
        %v1171 = vld [vmem:[#allocation2 + $0x148] sm:$0xff]
        %v1172 = vld [vmem:[#allocation2 + $0x150] sm:$0xff]
        %v1173 = vld [vmem:[#allocation2 + $0x158] sm:$0xff]
        %v1174 = vld [vmem:[#allocation2 + $0x160] sm:$0xff]
        %v1175 = vld [vmem:[#allocation2 + $0x168] sm:$0xff]
        %v1176 = vld [vmem:[#allocation2 + $0x170] sm:$0xff]
        %v1177 = vld [vmem:[#allocation2 + $0x178] sm:$0xff]
        %1178 = vmatprep.subr.bf16.mxu0 %v1131
        %1179 = vmatpush1.bf16.msra.mxu0 %v1130
        %1180 = vmatprep.subr.bf16.mxu0 %v1137
        %1181 = vmatpush1.bf16.msra.mxu0 %v1136
        %1182 = vmatprep.subr.bf16.mxu0 %v1143
        %1183 = vmatpush1.bf16.msra.mxu0 %v1142
        %1184 = vmatprep.subr.bf16.mxu0 %v1149
        %1185 = vmatpush1.bf16.msra.mxu0 %v1148
        %1186 = vmatprep.subr.bf16.mxu0 %v1155
        %1187 = vmatpush1.bf16.msra.mxu0 %v1154
        %1188 = vmatprep.subr.bf16.mxu0 %v1161
        %1189 = vmatpush1.bf16.msra.mxu0 %v1160
        %1190 = vmatprep.subr.bf16.mxu0 %v1167
        %1191 = vmatpush1.bf16.msra.mxu0 %v1166
        %1192 = vmatprep.subr.bf16.mxu0 %v1173
        %1193 = vmatpush1.bf16.msra.mxu0 %v1172
        %1194 = vmatprep.subr.bf16.mxu0 0
        %1195 = vmatpush1.bf16.msra.mxu0 0
        %1196 = vmatprep.subr.bf16.mxu0 0
        %1197 = vmatpush1.bf16.msra.mxu0 0
        %1198 = vmatprep.subr.bf16.mxu0 0
        %1199 = vmatpush1.bf16.msra.mxu0 0
        %1200 = vmatprep.subr.bf16.mxu0 0
        %1201 = vmatpush1.bf16.msra.mxu0 0
        %1202 = vmatprep.subr.bf16.mxu0 0
        %1203 = vmatpush1.bf16.msra.mxu0 0
        %1204 = vmatprep.subr.bf16.mxu0 0
        %1205 = vmatpush1.bf16.msra.mxu0 0
        %1206 = vmatprep.subr.bf16.mxu0 0
        %1207 = vmatpush1.bf16.msra.mxu0 0
        %1208 = vmatprep.subr.bf16.mxu0 0
        %1209 = vmatpush1.bf16.msra.mxu0 0
        %1210 = vmatprep.mubr.bf16.mxu0 0
        %1211 = vmatmul.mubr.bf16.gmra.mrb[0].mxu0 %v1129
        %v1212 = vpop.f32.mrb[0].mxu0
        %v1213 = vadd.f32 0.0, %v1212
        %v1214 = vpop.f32.mrb[0].mxu0
        %v1215 = vadd.f32 0.0, %v1214
        %v1216 = vpop.f32.mrb[0].mxu0
        %v1217 = vpop.f32.mrb[0].mxu0
        %1218 = vdwg.mxu0
        %1219 = vmatprep.subr.bf16.mxu0 %v1133
        %1220 = vmatpush1.bf16.msra.mxu0 %v1132
        %1221 = vmatprep.subr.bf16.mxu0 %v1139
        %1222 = vmatpush1.bf16.msra.mxu0 %v1138
        %1223 = vmatprep.subr.bf16.mxu0 %v1145
        %1224 = vmatpush1.bf16.msra.mxu0 %v1144
        %1225 = vmatprep.subr.bf16.mxu0 %v1151
        %1226 = vmatpush1.bf16.msra.mxu0 %v1150
        %1227 = vmatprep.subr.bf16.mxu0 %v1157
        %1228 = vmatpush1.bf16.msra.mxu0 %v1156
        %1229 = vmatprep.subr.bf16.mxu0 %v1163
        %1230 = vmatpush1.bf16.msra.mxu0 %v1162
        %1231 = vmatprep.subr.bf16.mxu0 %v1169
        %1232 = vmatpush1.bf16.msra.mxu0 %v1168
        %1233 = vmatprep.subr.bf16.mxu0 %v1175
        %1234 = vmatpush1.bf16.msra.mxu0 %v1174
        %1235 = vmatprep.subr.bf16.mxu0 0
        %1236 = vmatpush1.bf16.msra.mxu0 0
        %1237 = vmatprep.subr.bf16.mxu0 0
        %1238 = vmatpush1.bf16.msra.mxu0 0
        %1239 = vmatprep.subr.bf16.mxu0 0
        %1240 = vmatpush1.bf16.msra.mxu0 0
        %1241 = vmatprep.subr.bf16.mxu0 0
        %1242 = vmatpush1.bf16.msra.mxu0 0
        %1243 = vmatprep.subr.bf16.mxu0 0
        %1244 = vmatpush1.bf16.msra.mxu0 0
        %1245 = vmatprep.subr.bf16.mxu0 0
        %1246 = vmatpush1.bf16.msra.mxu0 0
        %1247 = vmatprep.subr.bf16.mxu0 0
        %1248 = vmatpush1.bf16.msra.mxu0 0
        %1249 = vmatprep.subr.bf16.mxu0 0
        %1250 = vmatpush1.bf16.msra.mxu0 0
        %1251 = vmatprep.mubr.bf16.mxu0 0
        %1252 = vmatmul.mubr.bf16.gmra.mrb[0].mxu0 %v1129
        %v1253 = vpop.f32.mrb[0].mxu0
        %v1254 = vadd.f32 0.0, %v1253
        %v1255 = vpop.f32.mrb[0].mxu0
        %v1256 = vadd.f32 0.0, %v1255
        %v1257 = vpop.f32.mrb[0].mxu0
        %v1258 = vpop.f32.mrb[0].mxu0
        %1259 = vdwg.mxu0
        %1260 = vmatprep.subr.bf16.mxu0 %v1135
        %1261 = vmatpush1.bf16.msra.mxu0 %v1134
        %1262 = vmatprep.subr.bf16.mxu0 %v1141
        %1263 = vmatpush1.bf16.msra.mxu0 %v1140
        %1264 = vmatprep.subr.bf16.mxu0 %v1147
        %1265 = vmatpush1.bf16.msra.mxu0 %v1146
        %1266 = vmatprep.subr.bf16.mxu0 %v1153
        %1267 = vmatpush1.bf16.msra.mxu0 %v1152
        %1268 = vmatprep.subr.bf16.mxu0 %v1159
        %1269 = vmatpush1.bf16.msra.mxu0 %v1158
        %1270 = vmatprep.subr.bf16.mxu0 %v1165
        %1271 = vmatpush1.bf16.msra.mxu0 %v1164
        %1272 = vmatprep.subr.bf16.mxu0 %v1171
        %1273 = vmatpush1.bf16.msra.mxu0 %v1170
        %1274 = vmatprep.subr.bf16.mxu0 %v1177
        %1275 = vmatpush1.bf16.msra.mxu0 %v1176
        %1276 = vmatprep.subr.bf16.mxu0 0
        %1277 = vmatpush1.bf16.msra.mxu0 0
        %1278 = vmatprep.subr.bf16.mxu0 0
        %1279 = vmatpush1.bf16.msra.mxu0 0
        %1280 = vmatprep.subr.bf16.mxu0 0
        %1281 = vmatpush1.bf16.msra.mxu0 0
        %1282 = vmatprep.subr.bf16.mxu0 0
        %1283 = vmatpush1.bf16.msra.mxu0 0
        %1284 = vmatprep.subr.bf16.mxu0 0
        %1285 = vmatpush1.bf16.msra.mxu0 0
        %1286 = vmatprep.subr.bf16.mxu0 0
        %1287 = vmatpush1.bf16.msra.mxu0 0
        %1288 = vmatprep.subr.bf16.mxu0 0
        %1289 = vmatpush1.bf16.msra.mxu0 0
        %1290 = vmatprep.subr.bf16.mxu0 0
        %1291 = vmatpush1.bf16.msra.mxu0 0
        %1292 = vmatprep.mubr.bf16.mxu0 0
        %1293 = vmatmul.mubr.bf16.gmra.mrb[0].mxu0 %v1129
        %v1294 = vpop.f32.mrb[0].mxu0
        %v1295 = vadd.f32 0.0, %v1294
        %v1296 = vpop.f32.mrb[0].mxu0
        %v1297 = vadd.f32 0.0, %v1296
        %v1298 = vpop.f32.mrb[0].mxu0
        %v1299 = vpop.f32.mrb[0].mxu0
        %1300 = vdwg.mxu0
        %v1301 = vmax.f32 %v1213, 1.0
        %v1302 = vmax.f32 %v1215, 1.0
        %v1303 = vmax.f32 %v1254, 1.0
        %v1304 = vmax.f32 %v1256, 1.0
        %v1305 = vmax.f32 %v1295, 1.0
        %v1306 = vmax.f32 %v1297, 1.0
        %v1307 = vrcp.pop %v1301
        %v1308 = vrcp.pop %v1302
        %v1309 = vrcp.pop %v1303
        %v1310 = vrcp.pop %v1304
        %v1311 = vrcp.pop %v1305
        %v1312 = vrcp.pop %v1306
        %v1313 = vlaneseq
        %v1314 = vshrl.u32 %v1313, 7
        %v1315 = vsub.s32 6, %v1314
        %v1316 = vrot.slane %v1307, %v1315
        %v1317 = vlaneseq
        %v1318 = vshrl.u32 %v1317, 7
        %v1319 = vsub.s32 6, %v1318
        %v1320 = vrot.slane %v1308, %v1319
        %v1321 = vlaneseq
        %v1322 = vshrl.u32 %v1321, 7
        %v1323 = vsub.s32 6, %v1322
        %v1324 = vrot.slane %v1309, %v1323
        %v1325 = vlaneseq
        %v1326 = vshrl.u32 %v1325, 7
        %v1327 = vsub.s32 6, %v1326
        %v1328 = vrot.slane %v1310, %v1327
        %v1329 = vlaneseq
        %v1330 = vshrl.u32 %v1329, 7
        %v1331 = vsub.s32 6, %v1330
        %v1332 = vrot.slane %v1311, %v1331
        %v1333 = vlaneseq
        %v1334 = vshrl.u32 %v1333, 7
        %v1335 = vsub.s32 6, %v1334
        %v1336 = vrot.slane %v1312, %v1335
        %v1337 = vmul.f32 %v1213, %v1316
        %v1338 = vmul.f32 %v1215, %v1320
        %v1339 = vmul.f32 %v1254, %v1324
        %v1340 = vmul.f32 %v1256, %v1328
        %v1341 = vmul.f32 %v1295, %v1332
        %v1342 = vmul.f32 %v1297, %v1336
        %1343 = vst [vmem:[%s149] sm:$0xff] %v1337
        %1344 = vst [vmem:[%s149 + $0x8] sm:$0xff] %v1338
        %s1345 = scalar_lea.vmem %s149, 16 [#allocation3]
        %1346 = vst [vmem:[%s1345] sm:$0xff] %v1339
        %1347 = vst [vmem:[%s1345 + $0x8] sm:$0xff] %v1340
        %s1348 = scalar_lea.vmem %s149, 32 [#allocation3]
        %1349 = vst [vmem:[%s1348] sm:$0xff] %v1341
        %1350 = vst [vmem:[%s1348 + $0x8] sm:$0xff] %v1342
        %s1351 = sand.u32 %s76, 1
        %s1352 = scalar_lea.sflag [#allocation4], %s1351
        %s1353 = sand.u32 %s76, 1
        %s1354 = smul.addr %s1353, 48
        %s1355 = scalar_lea.vmem [#allocation3], %s1354
        // Predicated region
        $region29: #{tpu_custom_call.1} parent=27 // pred_check
          %p1356 = pneg %p86
        $region30: #{tpu_custom_call.1} parent=27 // pred_check_branch
          %1358 = sbr.rel (%p1356) target = $region32
        $region31: #{tpu_custom_call.1} parent=27 // pred_region
          %s1360 = ssub.s32 768, 768
          %1361 = vsyncadd %s1352, %s1360
          %s1362 = smul.addr %s16, 6
          %s1363 = smul.addr %s1362, 128
          %s1364 = scalar_lea.hbm %s2, %s1363
          %s1365 = sshll.u32 %s1355, 4
          %s1366 = int_to_ptr.vmem [resolvable:$true] %s1365
          %1371 = dma.vmem_to_hbm [thread:$0]  %s1366, 768, %s1364, %s1352, 256, 256, 16
        $region32: #{tpu_custom_call.1} parent=27 // pred_fallthru
          _
      $region28: #{tpu_custom_call.1} parent=5 // pred_fallthru
        _
      %p1372 = scmp.le.s32.totalorder 2, %s11
      // Predicated region
      $region33: #{tpu_custom_call.1} parent=5 // pred_check
        %p1373 = pneg %p1372
      $region34: #{tpu_custom_call.1} parent=5 // pred_check_branch
        %1375 = sbr.rel (%p1373) target = $region36
      $region35: #{tpu_custom_call.1} parent=5 // pred_region
        %s1376 = ssub.s32 %s11, 2
        // Predicated region
        $region37: #{tpu_custom_call.1} parent=35 // pred_check
          %p1377 = pneg %p92
        $region38: #{tpu_custom_call.1} parent=35 // pred_check_branch
          %1379 = sbr.rel (%p1377) target = $region40
        $region39: #{tpu_custom_call.1} parent=35 // pred_region
          %s1380 = sand.u32 %s77, 1
          %s1381 = scalar_lea.sflag [#allocation4], %s1380
          %s1382 = sand.u32 %s77, 1
          %s1383 = smul.addr %s1382, 48
          %s1384 = scalar_lea.vmem [#allocation3], %s1383
          %1385 = dma.done %s1381, 768
        $region40: #{tpu_custom_call.1} parent=35 // pred_fallthru
          _
      $region36: #{tpu_custom_call.1} parent=5 // pred_fallthru
        _
    $region6: #{tpu_custom_call.1} parent=1 // loop_footer
      %s15 = sadd.s32 1, %s11
    $region7: #{tpu_custom_call.1} parent=1 // loop_footer_branch
      %10 = sbr.rel target = $region3
    $region8: #{tpu_custom_call.1} parent=1 // loop_exit
      _
    %1386 = vsyncpa [#allocation4], 1
    %s1387 = scalar_lea.sflag [#allocation4], 1
    %1388 = vsyncpa %s1387, 1

</llo_original>
